<compile_context>
chip_gen: v5e
topology: v5e:2x2
jax: 0.10.0
libtpu: 0.0.40
codegen_flags: <defaults>
</compile_context>

<pallas_src>
import functools

import jax
import jax.numpy as jnp
from jax.experimental import pallas as pl
from jax.experimental.pallas import tpu as pltpu

# ----- module constants (from the PyTorch source) -----------------------------
LSTM_HIDDEN_DIM = 1000
ENCODER_HIDDEN_DIM = 500
DECODER_HIDDEN_DIM = 100


def _round_up(x, m):
    return (x + m - 1) // m * m


def _max_batch_tile():
    """Chip-aware cap on the batch tile: 2048 rows on 128 MiB-VMEM chips
    (v5e/v6e), 1024 rows otherwise (v7x's 64 MiB)."""
    try:
        info = pltpu.get_tpu_info()
        if int(getattr(info, "vmem_capacity_bytes", 0)) >= 100 * 1024 * 1024:
            return 2048
    except Exception:
        pass
    return 1024


_MAX_TILE = _max_batch_tile()


# ----- kernel -----------------------------------------------------------------
def _decoder_kernel(x_ref, w1_ref, b1_ref, w2_ref, b2_ref, w3_ref, b3_ref, o_ref):
    # One batch tile per grid step; weights/biases are grid-invariant (resident).
    # bf16 operands into the MXU, f32 accumulation, f32 bias add, bf16 writeback.
    x = x_ref[...]  # already bf16
    h1 = jnp.dot(x, w1_ref[...], preferred_element_type=jnp.float32) + b1_ref[...]
    h1 = jnp.maximum(h1, 0.0).astype(jnp.bfloat16)
    h2 = jnp.dot(h1, w2_ref[...], preferred_element_type=jnp.float32) + b2_ref[...]
    h2 = jnp.maximum(h2, 0.0).astype(jnp.bfloat16)
    o = jnp.dot(h2, w3_ref[...], preferred_element_type=jnp.float32) + b3_ref[...]
    o_ref[...] = o.astype(o_ref.dtype)


# ----- wrapper ----------------------------------------------------------------
@functools.partial(jax.jit, static_argnames=("output_dim", "trim"))
def decoder_forward(x, params, *, output_dim, trim=True):
    """x: (B, 1000), ideally bf16 (cast at the producer). params: padded bf16
    weights + f32 biases.  Returns (B, output_dim) bf16 (or the padded
    (B, ceil128(output_dim)) slab if trim=False)."""
    w1, b1, w2, b2, w3, b3 = (
        params["w1"], params["b1"], params["w2"], params["b2"], params["w3"], params["b3"]
    )
    if x.dtype != jnp.bfloat16:
        # Fallback only -- the producer (e.g. the LSTM) should already emit bf16
        # so this extra HBM pass never happens.
        x = x.astype(jnp.bfloat16)

    B, d_in = x.shape
    d_out_p = w3.shape[1]

    # Batch tiling with NO padding copy (Pallas masks the partial boundary block):
    #  * B <= 512: one full-extent tile (block == full dim, any B allowed).
    #  * B  > 512: >= 2 evenly sized, 8-row-aligned tiles (keeps both v7x TCs
    #    busy via "parallel"), capped at _MAX_TILE rows for VMEM.
    if B <= 512:
        block_b = B
    else:
        n_tiles = max(2, pl.cdiv(B, _MAX_TILE))
        block_b = _round_up(pl.cdiv(B, n_tiles), 8)
    grid = (pl.cdiv(B, block_b),)

    def const_spec(shape):
        # Grid-invariant block: fetched once, resident in VMEM for all steps.
        return pl.BlockSpec(shape, lambda i: (0, 0))

    flops = 2 * B * (
        d_in * w1.shape[1] + w2.shape[0] * w2.shape[1] + w3.shape[0] * d_out_p
    )
    bytes_accessed = (
        B * d_in * 2                                                # bf16 x in
        + sum(int(w.size) * 2 for w in (w1, w2, w3))                # bf16 weights
        + sum(int(b.size) * 4 for b in (b1, b2, b3))                # f32 biases
        + B * d_out_p * 2                                           # bf16 output
    )

    out_p = pl.pallas_call(
        _decoder_kernel,
        out_shape=jax.ShapeDtypeStruct((B, d_out_p), jnp.bfloat16),
        grid_spec=pl.GridSpec(
            grid=grid,
            in_specs=[
                pl.BlockSpec((block_b, d_in), lambda i: (i, 0)),    # x tile
                const_spec(w1.shape), const_spec(b1.shape),         # W1, b1
                const_spec(w2.shape), const_spec(b2.shape),         # W2, b2
                const_spec(w3.shape), const_spec(b3.shape),         # W3, b3
            ],
            out_specs=pl.BlockSpec((block_b, d_out_p), lambda i: (i, 0)),
        ),
        compiler_params=pltpu.CompilerParams(
            dimension_semantics=("parallel",),
            vmem_limit_bytes=(48 if _MAX_TILE >= 2048 else 32) * 1024 * 1024,
        ),
        cost_estimate=pl.CostEstimate(
            flops=int(flops), transcendentals=0, bytes_accessed=int(bytes_accessed)
        ),
    )(x, w1, b1, w2, b2, w3, b3)

    if trim:
        return out_p[:, :output_dim]
    return out_p


def init_decoder_params(key, output_dim):
    """Init mimicking PyTorch nn.Linear defaults (U[-1/sqrt(fan_in), +]).

    Returns (padded bf16/f32 params for the kernel, raw f32 params for reference).
    """
    dims = [
        (LSTM_HIDDEN_DIM, ENCODER_HIDDEN_DIM),
        (ENCODER_HIDDEN_DIM, DECODER_HIDDEN_DIM),
        (DECODER_HIDDEN_DIM, output_dim),
    ]
    # Input feature dim of layer 1 stays at 1000 (sublane-aligned, matches un-padded x).
    pad_in = [LSTM_HIDDEN_DIM,
              _round_up(ENCODER_HIDDEN_DIM, 128),
              _round_up(DECODER_HIDDEN_DIM, 128)]
    pad_out = [_round_up(ENCODER_HIDDEN_DIM, 128),
               _round_up(DECODER_HIDDEN_DIM, 128),
               _round_up(output_dim, 128)]

    params, raw = {}, {}
    keys = jax.random.split(key, 6)
    for idx, ((fi, fo), fip, fop) in enumerate(zip(dims, pad_in, pad_out), start=1):
        bound = 1.0 / jnp.sqrt(fi)
        w = jax.random.uniform(keys[2 * idx - 2], (fi, fo), jnp.float32, -bound, bound)
        b = jax.random.uniform(keys[2 * idx - 1], (fo,), jnp.float32, -bound, bound)
        raw[f"w{idx}"], raw[f"b{idx}"] = w, b
        w_p = jnp.zeros((fip, fop), jnp.float32).at[:fi, :fo].set(w).astype(jnp.bfloat16)
        b_p = jnp.zeros((1, fop), jnp.float32).at[0, :fo].set(b)
        params[f"w{idx}"], params[f"b{idx}"] = w_p, b_p
    return params, raw


def decoder_reference(x, raw):
    h = jnp.maximum(x @ raw["w1"] + raw["b1"], 0.0)
    h = jnp.maximum(h @ raw["w2"] + raw["b2"], 0.0)
    return h @ raw["w3"] + raw["b3"]


if __name__ == "__main__":
    output_dim = 63   # e.g. pose vector dim
    batch = 16

    key = jax.random.PRNGKey(0)
    kx, kp = jax.random.split(key)
    x_f32 = jax.random.normal(kx, (batch, LSTM_HIDDEN_DIM), jnp.float32)
    # Producer-side cast (in the real model the LSTM output would already be bf16).
    x_bf16 = x_f32.astype(jnp.bfloat16)

    params, raw = init_decoder_params(kp, output_dim)

    out = decoder_forward(x_bf16, params, output_dim=output_dim)
    out = jax.block_until_ready(out)

    # Reference on the same (bf16-rounded) inputs, in f32.
    ref = decoder_reference(x_bf16.astype(jnp.float32), raw)
    assert out.shape == (batch, output_dim), out.shape
    err = float(jnp.max(jnp.abs(out.astype(jnp.float32) - ref)))
    # bf16 weights/activations/output => looser tolerance than a pure-f32 path.
    assert err < 4e-2, f"max abs err {err}"

    print("KERNEL_OK")
</pallas_src>

<mosaic_0001>
module attributes {stable_mosaic.version = 11 : i64} {
  func.func @_decoder_kernel(%arg0: i32, %arg1: memref<16x1000xbf16, #tpu.memory_space<vmem>>, %arg2: memref<1000x512xbf16, #tpu.memory_space<vmem>>, %arg3: memref<1x512xf32, #tpu.memory_space<vmem>>, %arg4: memref<512x128xbf16, #tpu.memory_space<vmem>>, %arg5: memref<1x128xf32, #tpu.memory_space<vmem>>, %arg6: memref<128x128xbf16, #tpu.memory_space<vmem>>, %arg7: memref<1x128xf32, #tpu.memory_space<vmem>>, %arg8: memref<16x128xbf16, #tpu.memory_space<vmem>>) attributes {dimension_semantics = [#tpu.dimension_semantics<parallel>], iteration_bounds = array<i64: 1>, scalar_prefetch = 0 : i64, scratch_operands = 0 : i64, tpu.core_type = #tpu.core_type<tc>, window_params = [{transform_indices = @transform_0, window_bounds = array<i64: 16, 1000>}, {pipeline_mode = #tpu.pipeline_mode<synchronous>, transform_indices = @transform_1, window_bounds = array<i64: 1000, 512>}, {pipeline_mode = #tpu.pipeline_mode<synchronous>, transform_indices = @transform_2, window_bounds = array<i64: 1, 512>}, {pipeline_mode = #tpu.pipeline_mode<synchronous>, transform_indices = @transform_3, window_bounds = array<i64: 512, 128>}, {pipeline_mode = #tpu.pipeline_mode<synchronous>, transform_indices = @transform_4, window_bounds = array<i64: 1, 128>}, {pipeline_mode = #tpu.pipeline_mode<synchronous>, transform_indices = @transform_5, window_bounds = array<i64: 128, 128>}, {pipeline_mode = #tpu.pipeline_mode<synchronous>, transform_indices = @transform_6, window_bounds = array<i64: 1, 128>}, {transform_indices = @transform_7, window_bounds = array<i64: 16, 128>}]} {
    %c0 = arith.constant 0 : index
    %c0_0 = arith.constant 0 : index
    %0 = vector.load %arg1[%c0, %c0_0] : memref<16x1000xbf16, #tpu.memory_space<vmem>>, vector<16x1000xbf16>
    %c0_1 = arith.constant 0 : index
    %c0_2 = arith.constant 0 : index
    %1 = vector.load %arg2[%c0_1, %c0_2] : memref<1000x512xbf16, #tpu.memory_space<vmem>>, vector<1000x512xbf16>
    %cst = arith.constant dense<0.000000e+00> : vector<16x512xf32>
    %2 = tpu.matmul %0, %1, %cst {dimension_numbers = #tpu.dot_dimension_numbers<[1], [0], [0], [1], [0, 0, 1, 1], [], []>} : vector<16x1000xbf16>, vector<1000x512xbf16>, vector<16x512xf32> -> vector<16x512xf32>
    %c0_3 = arith.constant 0 : index
    %c0_4 = arith.constant 0 : index
    %3 = vector.load %arg3[%c0_3, %c0_4] : memref<1x512xf32, #tpu.memory_space<vmem>>, vector<1x512xf32>
    %4 = vector.broadcast %3 : vector<1x512xf32> to vector<16x512xf32>
    %5 = arith.addf %2, %4 : vector<16x512xf32>
    %cst_5 = arith.constant 0.000000e+00 : f32
    %6 = vector.broadcast %cst_5 : f32 to vector<16x512xf32>
    %7 = arith.maximumf %5, %6 : vector<16x512xf32>
    %8 = arith.truncf %7 : vector<16x512xf32> to vector<16x512xbf16>
    %c0_6 = arith.constant 0 : index
    %c0_7 = arith.constant 0 : index
    %9 = vector.load %arg4[%c0_6, %c0_7] : memref<512x128xbf16, #tpu.memory_space<vmem>>, vector<512x128xbf16>
    %cst_8 = arith.constant dense<0.000000e+00> : vector<16x128xf32>
    %10 = tpu.matmul %8, %9, %cst_8 {dimension_numbers = #tpu.dot_dimension_numbers<[1], [0], [0], [1], [0, 0, 1, 1], [], []>} : vector<16x512xbf16>, vector<512x128xbf16>, vector<16x128xf32> -> vector<16x128xf32>
    %c0_9 = arith.constant 0 : index
    %c0_10 = arith.constant 0 : index
    %11 = vector.load %arg5[%c0_9, %c0_10] : memref<1x128xf32, #tpu.memory_space<vmem>>, vector<1x128xf32>
    %12 = vector.broadcast %11 : vector<1x128xf32> to vector<16x128xf32>
    %13 = arith.addf %10, %12 : vector<16x128xf32>
    %cst_11 = arith.constant 0.000000e+00 : f32
    %14 = vector.broadcast %cst_11 : f32 to vector<16x128xf32>
    %15 = arith.maximumf %13, %14 : vector<16x128xf32>
    %16 = arith.truncf %15 : vector<16x128xf32> to vector<16x128xbf16>
    %c0_12 = arith.constant 0 : index
    %c0_13 = arith.constant 0 : index
    %17 = vector.load %arg6[%c0_12, %c0_13] : memref<128x128xbf16, #tpu.memory_space<vmem>>, vector<128x128xbf16>
    %cst_14 = arith.constant dense<0.000000e+00> : vector<16x128xf32>
    %18 = tpu.matmul %16, %17, %cst_14 {dimension_numbers = #tpu.dot_dimension_numbers<[1], [0], [0], [1], [0, 0, 1, 1], [], []>} : vector<16x128xbf16>, vector<128x128xbf16>, vector<16x128xf32> -> vector<16x128xf32>
    %c0_15 = arith.constant 0 : index
    %c0_16 = arith.constant 0 : index
    %19 = vector.load %arg7[%c0_15, %c0_16] : memref<1x128xf32, #tpu.memory_space<vmem>>, vector<1x128xf32>
    %20 = vector.broadcast %19 : vector<1x128xf32> to vector<16x128xf32>
    %21 = arith.addf %18, %20 : vector<16x128xf32>
    %22 = arith.truncf %21 : vector<16x128xf32> to vector<16x128xbf16>
    %c0_17 = arith.constant 0 : index
    %c0_18 = arith.constant 0 : index
    %23 = vector.load %arg8[%c0_17, %c0_18] : memref<16x128xbf16, #tpu.memory_space<vmem>>, vector<16x128xbf16>
    tpu.vector_store %arg8[%c0_17, %c0_18], %22 {strides = array<i32>} : memref<16x128xbf16, #tpu.memory_space<vmem>>, vector<16x128xbf16>,
    return
  }
  func.func @transform_0(%arg0: i32) -> (i32, i32) {
    %c0_i32 = arith.constant 0 : i32
    %c0_i32_0 = arith.constant 0 : i32
    return %arg0, %c0_i32 : i32, i32
  }
  func.func @transform_1(%arg0: i32) -> (i32, i32) {
    %c0_i32 = arith.constant 0 : i32
    %c0_i32_0 = arith.constant 0 : i32
    %c0_i32_1 = arith.constant 0 : i32
    return %c0_i32, %c0_i32_0 : i32, i32
  }
  func.func @transform_2(%arg0: i32) -> (i32, i32) {
    %c0_i32 = arith.constant 0 : i32
    %c0_i32_0 = arith.constant 0 : i32
    %c0_i32_1 = arith.constant 0 : i32
    return %c0_i32, %c0_i32_0 : i32, i32
  }
  func.func @transform_3(%arg0: i32) -> (i32, i32) {
    %c0_i32 = arith.constant 0 : i32
    %c0_i32_0 = arith.constant 0 : i32
    %c0_i32_1 = arith.constant 0 : i32
    return %c0_i32, %c0_i32_0 : i32, i32
  }
  func.func @transform_4(%arg0: i32) -> (i32, i32) {
    %c0_i32 = arith.constant 0 : i32
    %c0_i32_0 = arith.constant 0 : i32
    %c0_i32_1 = arith.constant 0 : i32
    return %c0_i32, %c0_i32_0 : i32, i32
  }
  func.func @transform_5(%arg0: i32) -> (i32, i32) {
    %c0_i32 = arith.constant 0 : i32
    %c0_i32_0 = arith.constant 0 : i32
    %c0_i32_1 = arith.constant 0 : i32
    return %c0_i32, %c0_i32_0 : i32, i32
  }
  func.func @transform_6(%arg0: i32) -> (i32, i32) {
    %c0_i32 = arith.constant 0 : i32
    %c0_i32_0 = arith.constant 0 : i32
    %c0_i32_1 = arith.constant 0 : i32
    return %c0_i32, %c0_i32_0 : i32, i32
  }
  func.func @transform_7(%arg0: i32) -> (i32, i32) {
    %c0_i32 = arith.constant 0 : i32
    %c0_i32_0 = arith.constant 0 : i32
    return %arg0, %c0_i32 : i32, i32
  }
}

</mosaic_0001>

<llo_original>
// kernel: decoder_forward.1
$region0: #{decoder_forward.1}
  #allocation0 [shape = 'u32[]', space=smem, size = 0x4, offset = 0x4, fixed_abs, tag = 'smem constant byte address 0x4 - core index']
  #allocation1 [shape = 'u32[72,128]{1,0:T(1,128)}', space=vmem, size = 0x9000, scoped, tag = 'internal scratch']
  %s0 = inlined_call_operand.hbm [shape: bf16[16,1000], index: 0, kind: input, shape index: {}]
  %s1 = inlined_call_operand.hbm [shape: bf16[1000,512], index: 1, kind: input, shape index: {}]
  %s2 = inlined_call_operand.hbm [shape: f32[1,512], index: 2, kind: input, shape index: {}]
  %s3 = inlined_call_operand.hbm [shape: bf16[512,128], index: 3, kind: input, shape index: {}]
  %s4 = inlined_call_operand.vmem [shape: f32[1,128], index: 4, kind: input, shape index: {}]
  %s5 = inlined_call_operand.hbm [shape: bf16[128,128], index: 5, kind: input, shape index: {}]
  %s6 = inlined_call_operand.vmem [shape: f32[1,128], index: 6, kind: input, shape index: {}]
  %s7 = inlined_call_operand.hbm [shape: bf16[16,128], index: 7, kind: output, shape index: {}]
  %s8 = sld [smem:[#allocation0]]
  $region58: #{decoder_forward.1} parent=0
    _
  %s10 = ssub.s32 1, %s8
  %s11 = scalar_select 0, %s10, %s8
  $region1: #{decoder_forward.1} parent=0
    #allocation2 [shape = 'u8[32768]{0}', space=vmem, size = 0x8000, scoped, tag = 'input window, operand 0, single buffered']
    #allocation3 [shape = 's32[1]{0}', space=sflag, size = 0x4, scoped, tag = 'scoped memory for decoder_forward.1']
    #allocation4 [shape = 's32[1]{0}', space=sflag, size = 0x4, scoped, tag = 'scoped memory for decoder_forward.1']
    #allocation5 [shape = 'u8[1024000]{0}', space=vmem, size = 0xfa000, scoped, tag = 'input window, operand 1, single buffered']
    #allocation6 [shape = 's32[1]{0}', space=sflag, size = 0x4, scoped, tag = 'scoped memory for decoder_forward.1']
    #allocation7 [shape = 'u8[2048]{0}', space=vmem, size = 0x800, scoped, tag = 'input window, operand 2, single buffered']
    #allocation8 [shape = 'u8[131072]{0}', space=vmem, size = 0x20000, scoped, tag = 'input window, operand 3, single buffered']
    #allocation9 [shape = 's32[1]{0}', space=sflag, size = 0x4, scoped, tag = 'scoped memory for decoder_forward.1']
    #allocation10 [shape = 'u8[32768]{0}', space=vmem, size = 0x8000, scoped, tag = 'input window, operand 5, single buffered']
    #allocation11 [shape = 'u8[4096]{0}', space=vmem, size = 0x1000, scoped, tag = 'output window, operand 0, single buffered']
    %12 = vsyncpa [#allocation3], 0
    %13 = vsyncpa [#allocation6], 0
    %14 = vsyncpa [#allocation9], 0
    %15 = vsyncpa [#allocation4], 0
    // Predicated region
    $region2: #{decoder_forward.1} parent=1 // pred_check
      _
    $region3: #{decoder_forward.1} parent=1 // pred_check_branch
      %17 = sbr.rel (0) target = $region5
    $region4: #{decoder_forward.1} parent=1 // pred_region
      %19 = vsyncadd [#allocation3], 0
      %s20 = sshll.u32 %s0, 4
      %s21 = int_to_ptr.hbm [resolvable:$true] %s20
      %s22 = sshll.u32 [#allocation2], 4
      %s23 = int_to_ptr.vmem [resolvable:$true] %s22
      %28 = dma.hbm_to_vmem [thread:$0]  %s21, 1024, %s23, [#allocation3], 512, 512, 32
    $region5: #{decoder_forward.1} parent=1 // pred_fallthru
      _
    // Predicated region
    $region6: #{decoder_forward.1} parent=1 // pred_check
      _
    $region7: #{decoder_forward.1} parent=1 // pred_check_branch
      %30 = sbr.rel (0) target = $region9
    $region8: #{decoder_forward.1} parent=1 // pred_region
      %32 = vsyncadd [#allocation6], 0
      %s33 = sshll.u32 %s1, 4
      %s34 = int_to_ptr.hbm [resolvable:$true] %s33
      %s35 = sshll.u32 [#allocation5], 4
      %s36 = int_to_ptr.vmem [resolvable:$true] %s35
      %41 = dma.hbm_to_vmem [thread:$0]  %s34, 32000, %s36, [#allocation6], 256, 256, 16
    $region9: #{decoder_forward.1} parent=1 // pred_fallthru
      _
    // Predicated region
    $region10: #{decoder_forward.1} parent=1 // pred_check
      _
    $region11: #{decoder_forward.1} parent=1 // pred_check_branch
      %43 = sbr.rel (0) target = $region13
    $region12: #{decoder_forward.1} parent=1 // pred_region
      %45 = vsyncadd [#allocation6], 0
      %s47 = sshll.u32 %s2, 4
      %s48 = int_to_ptr.hbm [resolvable:$true] %s47
      %s49 = sshll.u32 [#allocation7], 4
      %s50 = int_to_ptr.vmem [resolvable:$true] %s49
      %52 = dma.hbm_to_vmem [thread:$0]  %s48, 64, %s50, [#allocation6]
    $region13: #{decoder_forward.1} parent=1 // pred_fallthru
      _
    // Predicated region
    $region14: #{decoder_forward.1} parent=1 // pred_check
      _
    $region15: #{decoder_forward.1} parent=1 // pred_check_branch
      %54 = sbr.rel (0) target = $region17
    $region16: #{decoder_forward.1} parent=1 // pred_region
      %56 = vsyncadd [#allocation9], 0
      %s57 = sshll.u32 %s3, 4
      %s58 = int_to_ptr.hbm [resolvable:$true] %s57
      %s59 = sshll.u32 [#allocation8], 4
      %s60 = int_to_ptr.vmem [resolvable:$true] %s59
      %65 = dma.hbm_to_vmem [thread:$0]  %s58, 4096, %s60, [#allocation9], 64, 64, 4
    $region17: #{decoder_forward.1} parent=1 // pred_fallthru
      _
    // Predicated region
    $region18: #{decoder_forward.1} parent=1 // pred_check
      _
    $region19: #{decoder_forward.1} parent=1 // pred_check_branch
      %67 = sbr.rel (0) target = $region21
    $region20: #{decoder_forward.1} parent=1 // pred_region
      _
    $region21: #{decoder_forward.1} parent=1 // pred_fallthru
      _
    // Predicated region
    $region22: #{decoder_forward.1} parent=1 // pred_check
      _
    $region23: #{decoder_forward.1} parent=1 // pred_check_branch
      %69 = sbr.rel (0) target = $region25
    $region24: #{decoder_forward.1} parent=1 // pred_region
      %71 = vsyncadd [#allocation9], 0
      %s72 = sshll.u32 %s5, 4
      %s73 = int_to_ptr.hbm [resolvable:$true] %s72
      %s74 = sshll.u32 [#allocation10], 4
      %s75 = int_to_ptr.vmem [resolvable:$true] %s74
      %80 = dma.hbm_to_vmem [thread:$0]  %s73, 1024, %s75, [#allocation9], 64, 64, 4
    $region25: #{decoder_forward.1} parent=1 // pred_fallthru
      _
    // Predicated region
    $region26: #{decoder_forward.1} parent=1 // pred_check
      _
    $region27: #{decoder_forward.1} parent=1 // pred_check_branch
      %82 = sbr.rel (0) target = $region29
    $region28: #{decoder_forward.1} parent=1 // pred_region
      _
    $region29: #{decoder_forward.1} parent=1 // pred_fallthru
      _
    // Predicated region
    $region30: #{decoder_forward.1} parent=1 // pred_check
      _
    $region31: #{decoder_forward.1} parent=1 // pred_check_branch
      %84 = sbr.rel (0) target = $region33
    $region32: #{decoder_forward.1} parent=1 // pred_region
      %86 = dma.done [#allocation3], 1024
    $region33: #{decoder_forward.1} parent=1 // pred_fallthru
      _
    // Predicated region
    $region34: #{decoder_forward.1} parent=1 // pred_check
      _
    $region35: #{decoder_forward.1} parent=1 // pred_check_branch
      %88 = sbr.rel (0) target = $region37
    $region36: #{decoder_forward.1} parent=1 // pred_region
      %90 = dma.done [#allocation6], 32000
    $region37: #{decoder_forward.1} parent=1 // pred_fallthru
      _
    // Predicated region
    $region38: #{decoder_forward.1} parent=1 // pred_check
      _
    $region39: #{decoder_forward.1} parent=1 // pred_check_branch
      %92 = sbr.rel (0) target = $region41
    $region40: #{decoder_forward.1} parent=1 // pred_region
      %94 = dma.done [#allocation6], 64
    $region41: #{decoder_forward.1} parent=1 // pred_fallthru
      _
    // Predicated region
    $region42: #{decoder_forward.1} parent=1 // pred_check
      _
    $region43: #{decoder_forward.1} parent=1 // pred_check_branch
      %96 = sbr.rel (0) target = $region45
    $region44: #{decoder_forward.1} parent=1 // pred_region
      %98 = dma.done [#allocation9], 4096
    $region45: #{decoder_forward.1} parent=1 // pred_fallthru
      _
    // Predicated region
    $region46: #{decoder_forward.1} parent=1 // pred_check
      _
    $region47: #{decoder_forward.1} parent=1 // pred_check_branch
      %100 = sbr.rel (0) target = $region49
    $region48: #{decoder_forward.1} parent=1 // pred_region
      %102 = dma.done [#allocation9], 1024
    $region49: #{decoder_forward.1} parent=1 // pred_fallthru
      _
    %v104 = vld [vmem:[#allocation2] sm:$0xff]
    %v105 = vld [vmem:[#allocation2 + $0x8] sm:$0xff]
    %v106 = vld [vmem:[#allocation2 + $0x10] sm:$0xff]
    %v107 = vld [vmem:[#allocation2 + $0x18] sm:$0xff]
    %v108 = vld [vmem:[#allocation2 + $0x20] sm:$0xff]
    %v109 = vld [vmem:[#allocation2 + $0x28] sm:$0xff]
    %v110 = vld [vmem:[#allocation2 + $0x30] sm:$0xff]
    %v111 = vld [vmem:[#allocation2 + $0x38] sm:$0xff]
    %v112 = vld [vmem:[#allocation5] sm:$0xff]
    %v113 = vld [vmem:[#allocation5 + $0x8] sm:$0xff]
    %v114 = vld [vmem:[#allocation5 + $0x10] sm:$0xff]
    %v115 = vld [vmem:[#allocation5 + $0x18] sm:$0xff]
    %v116 = vld [vmem:[#allocation5 + $0x20] sm:$0xff]
    %v117 = vld [vmem:[#allocation5 + $0x28] sm:$0xff]
    %v118 = vld [vmem:[#allocation5 + $0x30] sm:$0xff]
    %v119 = vld [vmem:[#allocation5 + $0x38] sm:$0xff]
    %v120 = vld [vmem:[#allocation5 + $0x40] sm:$0xff]
    %v121 = vld [vmem:[#allocation5 + $0x48] sm:$0xff]
    %v122 = vld [vmem:[#allocation5 + $0x50] sm:$0xff]
    %v123 = vld [vmem:[#allocation5 + $0x58] sm:$0xff]
    %v124 = vld [vmem:[#allocation5 + $0x60] sm:$0xff]
    %v125 = vld [vmem:[#allocation5 + $0x68] sm:$0xff]
    %v126 = vld [vmem:[#allocation5 + $0x70] sm:$0xff]
    %v127 = vld [vmem:[#allocation5 + $0x78] sm:$0xff]
    %v128 = vld [vmem:[#allocation5 + $0x80] sm:$0xff]
    %v129 = vld [vmem:[#allocation5 + $0x88] sm:$0xff]
    %v130 = vld [vmem:[#allocation5 + $0x90] sm:$0xff]
    %v131 = vld [vmem:[#allocation5 + $0x98] sm:$0xff]
    %v132 = vld [vmem:[#allocation5 + $0xa0] sm:$0xff]
    %v133 = vld [vmem:[#allocation5 + $0xa8] sm:$0xff]
    %v134 = vld [vmem:[#allocation5 + $0xb0] sm:$0xff]
    %v135 = vld [vmem:[#allocation5 + $0xb8] sm:$0xff]
    %v136 = vld [vmem:[#allocation5 + $0xc0] sm:$0xff]
    %v137 = vld [vmem:[#allocation5 + $0xc8] sm:$0xff]
    %v138 = vld [vmem:[#allocation5 + $0xd0] sm:$0xff]
    %v139 = vld [vmem:[#allocation5 + $0xd8] sm:$0xff]
    %v140 = vld [vmem:[#allocation5 + $0xe0] sm:$0xff]
    %v141 = vld [vmem:[#allocation5 + $0xe8] sm:$0xff]
    %v142 = vld [vmem:[#allocation5 + $0xf0] sm:$0xff]
    %v143 = vld [vmem:[#allocation5 + $0xf8] sm:$0xff]
    %v144 = vld [vmem:[#allocation5 + $0x100] sm:$0xff]
    %v145 = vld [vmem:[#allocation5 + $0x108] sm:$0xff]
    %v146 = vld [vmem:[#allocation5 + $0x110] sm:$0xff]
    %v147 = vld [vmem:[#allocation5 + $0x118] sm:$0xff]
    %v148 = vld [vmem:[#allocation5 + $0x120] sm:$0xff]
    %v149 = vld [vmem:[#allocation5 + $0x128] sm:$0xff]
    %v150 = vld [vmem:[#allocation5 + $0x130] sm:$0xff]
    %v151 = vld [vmem:[#allocation5 + $0x138] sm:$0xff]
    %v152 = vld [vmem:[#allocation5 + $0x140] sm:$0xff]
    %v153 = vld [vmem:[#allocation5 + $0x148] sm:$0xff]
    %v154 = vld [vmem:[#allocation5 + $0x150] sm:$0xff]
    %v155 = vld [vmem:[#allocation5 + $0x158] sm:$0xff]
    %v156 = vld [vmem:[#allocation5 + $0x160] sm:$0xff]
    %v157 = vld [vmem:[#allocation5 + $0x168] sm:$0xff]
    %v158 = vld [vmem:[#allocation5 + $0x170] sm:$0xff]
    %v159 = vld [vmem:[#allocation5 + $0x178] sm:$0xff]
    %v160 = vld [vmem:[#allocation5 + $0x180] sm:$0xff]
    %v161 = vld [vmem:[#allocation5 + $0x188] sm:$0xff]
    %v162 = vld [vmem:[#allocation5 + $0x190] sm:$0xff]
    %v163 = vld [vmem:[#allocation5 + $0x198] sm:$0xff]
    %v164 = vld [vmem:[#allocation5 + $0x1a0] sm:$0xff]
    %v165 = vld [vmem:[#allocation5 + $0x1a8] sm:$0xff]
    %v166 = vld [vmem:[#allocation5 + $0x1b0] sm:$0xff]
    %v167 = vld [vmem:[#allocation5 + $0x1b8] sm:$0xff]
    %v168 = vld [vmem:[#allocation5 + $0x1c0] sm:$0xff]
    %v169 = vld [vmem:[#allocation5 + $0x1c8] sm:$0xff]
    %v170 = vld [vmem:[#allocation5 + $0x1d0] sm:$0xff]
    %v171 = vld [vmem:[#allocation5 + $0x1d8] sm:$0xff]
    %v172 = vld [vmem:[#allocation5 + $0x1e0] sm:$0xff]
    %v173 = vld [vmem:[#allocation5 + $0x1e8] sm:$0xff]
    %v174 = vld [vmem:[#allocation5 + $0x1f0] sm:$0xff]
    %v175 = vld [vmem:[#allocation5 + $0x1f8] sm:$0xff]
    %v176 = vld [vmem:[#allocation5 + $0x200] sm:$0xff]
    %v177 = vld [vmem:[#allocation5 + $0x208] sm:$0xff]
    %v178 = vld [vmem:[#allocation5 + $0x210] sm:$0xff]
    %v179 = vld [vmem:[#allocation5 + $0x218] sm:$0xff]
    %v180 = vld [vmem:[#allocation5 + $0x220] sm:$0xff]
    %v181 = vld [vmem:[#allocation5 + $0x228] sm:$0xff]
    %v182 = vld [vmem:[#allocation5 + $0x230] sm:$0xff]
    %v183 = vld [vmem:[#allocation5 + $0x238] sm:$0xff]
    %v184 = vld [vmem:[#allocation5 + $0x240] sm:$0xff]
    %v185 = vld [vmem:[#allocation5 + $0x248] sm:$0xff]
    %v186 = vld [vmem:[#allocation5 + $0x250] sm:$0xff]
    %v187 = vld [vmem:[#allocation5 + $0x258] sm:$0xff]
    %v188 = vld [vmem:[#allocation5 + $0x260] sm:$0xff]
    %v189 = vld [vmem:[#allocation5 + $0x268] sm:$0xff]
    %v190 = vld [vmem:[#allocation5 + $0x270] sm:$0xff]
    %v191 = vld [vmem:[#allocation5 + $0x278] sm:$0xff]
    %v192 = vld [vmem:[#allocation5 + $0x280] sm:$0xff]
    %v193 = vld [vmem:[#allocation5 + $0x288] sm:$0xff]
    %v194 = vld [vmem:[#allocation5 + $0x290] sm:$0xff]
    %v195 = vld [vmem:[#allocation5 + $0x298] sm:$0xff]
    %v196 = vld [vmem:[#allocation5 + $0x2a0] sm:$0xff]
    %v197 = vld [vmem:[#allocation5 + $0x2a8] sm:$0xff]
    %v198 = vld [vmem:[#allocation5 + $0x2b0] sm:$0xff]
    %v199 = vld [vmem:[#allocation5 + $0x2b8] sm:$0xff]
    %v200 = vld [vmem:[#allocation5 + $0x2c0] sm:$0xff]
    %v201 = vld [vmem:[#allocation5 + $0x2c8] sm:$0xff]
    %v202 = vld [vmem:[#allocation5 + $0x2d0] sm:$0xff]
    %v203 = vld [vmem:[#allocation5 + $0x2d8] sm:$0xff]
    %v204 = vld [vmem:[#allocation5 + $0x2e0] sm:$0xff]
    %v205 = vld [vmem:[#allocation5 + $0x2e8] sm:$0xff]
    %v206 = vld [vmem:[#allocation5 + $0x2f0] sm:$0xff]
    %v207 = vld [vmem:[#allocation5 + $0x2f8] sm:$0xff]
    %v208 = vld [vmem:[#allocation5 + $0x300] sm:$0xff]
    %v209 = vld [vmem:[#allocation5 + $0x308] sm:$0xff]
    %v210 = vld [vmem:[#allocation5 + $0x310] sm:$0xff]
    %v211 = vld [vmem:[#allocation5 + $0x318] sm:$0xff]
    %v212 = vld [vmem:[#allocation5 + $0x320] sm:$0xff]
    %v213 = vld [vmem:[#allocation5 + $0x328] sm:$0xff]
    %v214 = vld [vmem:[#allocation5 + $0x330] sm:$0xff]
    %v215 = vld [vmem:[#allocation5 + $0x338] sm:$0xff]
    %v216 = vld [vmem:[#allocation5 + $0x340] sm:$0xff]
    %v217 = vld [vmem:[#allocation5 + $0x348] sm:$0xff]
    %v218 = vld [vmem:[#allocation5 + $0x350] sm:$0xff]
    %v219 = vld [vmem:[#allocation5 + $0x358] sm:$0xff]
    %v220 = vld [vmem:[#allocation5 + $0x360] sm:$0xff]
    %v221 = vld [vmem:[#allocation5 + $0x368] sm:$0xff]
    %v222 = vld [vmem:[#allocation5 + $0x370] sm:$0xff]
    %v223 = vld [vmem:[#allocation5 + $0x378] sm:$0xff]
    %v224 = vld [vmem:[#allocation5 + $0x380] sm:$0xff]
    %v225 = vld [vmem:[#allocation5 + $0x388] sm:$0xff]
    %v226 = vld [vmem:[#allocation5 + $0x390] sm:$0xff]
    %v227 = vld [vmem:[#allocation5 + $0x398] sm:$0xff]
    %v228 = vld [vmem:[#allocation5 + $0x3a0] sm:$0xff]
    %v229 = vld [vmem:[#allocation5 + $0x3a8] sm:$0xff]
    %v230 = vld [vmem:[#allocation5 + $0x3b0] sm:$0xff]
    %v231 = vld [vmem:[#allocation5 + $0x3b8] sm:$0xff]
    %v232 = vld [vmem:[#allocation5 + $0x3c0] sm:$0xff]
    %v233 = vld [vmem:[#allocation5 + $0x3c8] sm:$0xff]
    %v234 = vld [vmem:[#allocation5 + $0x3d0] sm:$0xff]
    %v235 = vld [vmem:[#allocation5 + $0x3d8] sm:$0xff]
    %v236 = vld [vmem:[#allocation5 + $0x3e0] sm:$0xff]
    %v237 = vld [vmem:[#allocation5 + $0x3e8] sm:$0xff]
    %v238 = vld [vmem:[#allocation5 + $0x3f0] sm:$0xff]
    %v239 = vld [vmem:[#allocation5 + $0x3f8] sm:$0xff]
    %v240 = vld [vmem:[#allocation5 + $0x400] sm:$0xff]
    %v241 = vld [vmem:[#allocation5 + $0x408] sm:$0xff]
    %v242 = vld [vmem:[#allocation5 + $0x410] sm:$0xff]
    %v243 = vld [vmem:[#allocation5 + $0x418] sm:$0xff]
    %v244 = vld [vmem:[#allocation5 + $0x420] sm:$0xff]
    %v245 = vld [vmem:[#allocation5 + $0x428] sm:$0xff]
    %v246 = vld [vmem:[#allocation5 + $0x430] sm:$0xff]
    %v247 = vld [vmem:[#allocation5 + $0x438] sm:$0xff]
    %v248 = vld [vmem:[#allocation5 + $0x440] sm:$0xff]
    %v249 = vld [vmem:[#allocation5 + $0x448] sm:$0xff]
    %v250 = vld [vmem:[#allocation5 + $0x450] sm:$0xff]
    %v251 = vld [vmem:[#allocation5 + $0x458] sm:$0xff]
    %v252 = vld [vmem:[#allocation5 + $0x460] sm:$0xff]
    %v253 = vld [vmem:[#allocation5 + $0x468] sm:$0xff]
    %v254 = vld [vmem:[#allocation5 + $0x470] sm:$0xff]
    %v255 = vld [vmem:[#allocation5 + $0x478] sm:$0xff]
    %v256 = vld [vmem:[#allocation5 + $0x480] sm:$0xff]
    %v257 = vld [vmem:[#allocation5 + $0x488] sm:$0xff]
    %v258 = vld [vmem:[#allocation5 + $0x490] sm:$0xff]
    %v259 = vld [vmem:[#allocation5 + $0x498] sm:$0xff]
    %v260 = vld [vmem:[#allocation5 + $0x4a0] sm:$0xff]
    %v261 = vld [vmem:[#allocation5 + $0x4a8] sm:$0xff]
    %v262 = vld [vmem:[#allocation5 + $0x4b0] sm:$0xff]
    %v263 = vld [vmem:[#allocation5 + $0x4b8] sm:$0xff]
    %v264 = vld [vmem:[#allocation5 + $0x4c0] sm:$0xff]
    %v265 = vld [vmem:[#allocation5 + $0x4c8] sm:$0xff]
    %v266 = vld [vmem:[#allocation5 + $0x4d0] sm:$0xff]
    %v267 = vld [vmem:[#allocation5 + $0x4d8] sm:$0xff]
    %v268 = vld [vmem:[#allocation5 + $0x4e0] sm:$0xff]
    %v269 = vld [vmem:[#allocation5 + $0x4e8] sm:$0xff]
    %v270 = vld [vmem:[#allocation5 + $0x4f0] sm:$0xff]
    %v271 = vld [vmem:[#allocation5 + $0x4f8] sm:$0xff]
    %v272 = vld [vmem:[#allocation5 + $0x500] sm:$0xff]
    %v273 = vld [vmem:[#allocation5 + $0x508] sm:$0xff]
    %v274 = vld [vmem:[#allocation5 + $0x510] sm:$0xff]
    %v275 = vld [vmem:[#allocation5 + $0x518] sm:$0xff]
    %v276 = vld [vmem:[#allocation5 + $0x520] sm:$0xff]
    %v277 = vld [vmem:[#allocation5 + $0x528] sm:$0xff]
    %v278 = vld [vmem:[#allocation5 + $0x530] sm:$0xff]
    %v279 = vld [vmem:[#allocation5 + $0x538] sm:$0xff]
    %v280 = vld [vmem:[#allocation5 + $0x540] sm:$0xff]
    %v281 = vld [vmem:[#allocation5 + $0x548] sm:$0xff]
    %v282 = vld [vmem:[#allocation5 + $0x550] sm:$0xff]
    %v283 = vld [vmem:[#allocation5 + $0x558] sm:$0xff]
    %v284 = vld [vmem:[#allocation5 + $0x560] sm:$0xff]
    %v285 = vld [vmem:[#allocation5 + $0x568] sm:$0xff]
    %v286 = vld [vmem:[#allocation5 + $0x570] sm:$0xff]
    %v287 = vld [vmem:[#allocation5 + $0x578] sm:$0xff]
    %v288 = vld [vmem:[#allocation5 + $0x580] sm:$0xff]
    %v289 = vld [vmem:[#allocation5 + $0x588] sm:$0xff]
    %v290 = vld [vmem:[#allocation5 + $0x590] sm:$0xff]
    %v291 = vld [vmem:[#allocation5 + $0x598] sm:$0xff]
    %v292 = vld [vmem:[#allocation5 + $0x5a0] sm:$0xff]
    %v293 = vld [vmem:[#allocation5 + $0x5a8] sm:$0xff]
    %v294 = vld [vmem:[#allocation5 + $0x5b0] sm:$0xff]
    %v295 = vld [vmem:[#allocation5 + $0x5b8] sm:$0xff]
    %v296 = vld [vmem:[#allocation5 + $0x5c0] sm:$0xff]
    %v297 = vld [vmem:[#allocation5 + $0x5c8] sm:$0xff]
    %v298 = vld [vmem:[#allocation5 + $0x5d0] sm:$0xff]
    %v299 = vld [vmem:[#allocation5 + $0x5d8] sm:$0xff]
    %v300 = vld [vmem:[#allocation5 + $0x5e0] sm:$0xff]
    %v301 = vld [vmem:[#allocation5 + $0x5e8] sm:$0xff]
    %v302 = vld [vmem:[#allocation5 + $0x5f0] sm:$0xff]
    %v303 = vld [vmem:[#allocation5 + $0x5f8] sm:$0xff]
    %v304 = vld [vmem:[#allocation5 + $0x600] sm:$0xff]
    %v305 = vld [vmem:[#allocation5 + $0x608] sm:$0xff]
    %v306 = vld [vmem:[#allocation5 + $0x610] sm:$0xff]
    %v307 = vld [vmem:[#allocation5 + $0x618] sm:$0xff]
    %v308 = vld [vmem:[#allocation5 + $0x620] sm:$0xff]
    %v309 = vld [vmem:[#allocation5 + $0x628] sm:$0xff]
    %v310 = vld [vmem:[#allocation5 + $0x630] sm:$0xff]
    %v311 = vld [vmem:[#allocation5 + $0x638] sm:$0xff]
    %v312 = vld [vmem:[#allocation5 + $0x640] sm:$0xff]
    %v313 = vld [vmem:[#allocation5 + $0x648] sm:$0xff]
    %v314 = vld [vmem:[#allocation5 + $0x650] sm:$0xff]
    %v315 = vld [vmem:[#allocation5 + $0x658] sm:$0xff]
    %v316 = vld [vmem:[#allocation5 + $0x660] sm:$0xff]
    %v317 = vld [vmem:[#allocation5 + $0x668] sm:$0xff]
    %v318 = vld [vmem:[#allocation5 + $0x670] sm:$0xff]
    %v319 = vld [vmem:[#allocation5 + $0x678] sm:$0xff]
    %v320 = vld [vmem:[#allocation5 + $0x680] sm:$0xff]
    %v321 = vld [vmem:[#allocation5 + $0x688] sm:$0xff]
    %v322 = vld [vmem:[#allocation5 + $0x690] sm:$0xff]
    %v323 = vld [vmem:[#allocation5 + $0x698] sm:$0xff]
    %v324 = vld [vmem:[#allocation5 + $0x6a0] sm:$0xff]
    %v325 = vld [vmem:[#allocation5 + $0x6a8] sm:$0xff]
    %v326 = vld [vmem:[#allocation5 + $0x6b0] sm:$0xff]
    %v327 = vld [vmem:[#allocation5 + $0x6b8] sm:$0xff]
    %v328 = vld [vmem:[#allocation5 + $0x6c0] sm:$0xff]
    %v329 = vld [vmem:[#allocation5 + $0x6c8] sm:$0xff]
    %v330 = vld [vmem:[#allocation5 + $0x6d0] sm:$0xff]
    %v331 = vld [vmem:[#allocation5 + $0x6d8] sm:$0xff]
    %v332 = vld [vmem:[#allocation5 + $0x6e0] sm:$0xff]
    %v333 = vld [vmem:[#allocation5 + $0x6e8] sm:$0xff]
    %v334 = vld [vmem:[#allocation5 + $0x6f0] sm:$0xff]
    %v335 = vld [vmem:[#allocation5 + $0x6f8] sm:$0xff]
    %v336 = vld [vmem:[#allocation5 + $0x700] sm:$0xff]
    %v337 = vld [vmem:[#allocation5 + $0x708] sm:$0xff]
    %v338 = vld [vmem:[#allocation5 + $0x710] sm:$0xff]
    %v339 = vld [vmem:[#allocation5 + $0x718] sm:$0xff]
    %v340 = vld [vmem:[#allocation5 + $0x720] sm:$0xff]
    %v341 = vld [vmem:[#allocation5 + $0x728] sm:$0xff]
    %v342 = vld [vmem:[#allocation5 + $0x730] sm:$0xff]
    %v343 = vld [vmem:[#allocation5 + $0x738] sm:$0xff]
    %v344 = vld [vmem:[#allocation5 + $0x740] sm:$0xff]
    %v345 = vld [vmem:[#allocation5 + $0x748] sm:$0xff]
    %v346 = vld [vmem:[#allocation5 + $0x750] sm:$0xff]
    %v347 = vld [vmem:[#allocation5 + $0x758] sm:$0xff]
    %v348 = vld [vmem:[#allocation5 + $0x760] sm:$0xff]
    %v349 = vld [vmem:[#allocation5 + $0x768] sm:$0xff]
    %v350 = vld [vmem:[#allocation5 + $0x770] sm:$0xff]
    %v351 = vld [vmem:[#allocation5 + $0x778] sm:$0xff]
    %v352 = vld [vmem:[#allocation5 + $0x780] sm:$0xff]
    %v353 = vld [vmem:[#allocation5 + $0x788] sm:$0xff]
    %v354 = vld [vmem:[#allocation5 + $0x790] sm:$0xff]
    %v355 = vld [vmem:[#allocation5 + $0x798] sm:$0xff]
    %v356 = vld [vmem:[#allocation5 + $0x7a0] sm:$0xff]
    %v357 = vld [vmem:[#allocation5 + $0x7a8] sm:$0xff]
    %v358 = vld [vmem:[#allocation5 + $0x7b0] sm:$0xff]
    %v359 = vld [vmem:[#allocation5 + $0x7b8] sm:$0xff]
    %v360 = vld [vmem:[#allocation5 + $0x7c0] sm:$0xff]
    %v361 = vld [vmem:[#allocation5 + $0x7c8] sm:$0xff]
    %v362 = vld [vmem:[#allocation7] sm:$0xf]
    %v364 = vperm.slane %v362, 0
    %v365 = vperm.slane %v362, 1
    %v366 = vperm.slane %v362, 2
    %v367 = vperm.slane %v362, 3
    %v380 = vunpack.c.l.b16 %v104
    %v381 = vunpack.c.h.b16 %v104
    %v382 = vunpack.c.l.b16 %v105
    %v383 = vunpack.c.h.b16 %v105
    %v384 = vunpack.c.l.b16 %v106
    %v385 = vunpack.c.h.b16 %v106
    %v386 = vunpack.c.l.b16 %v107
    %v387 = vunpack.c.h.b16 %v107
    %v388 = vunpack.c.l.b16 %v108
    %v389 = vunpack.c.h.b16 %v108
    %v390 = vunpack.c.l.b16 %v109
    %v391 = vunpack.c.h.b16 %v109
    %v392 = vunpack.c.l.b16 %v110
    %v393 = vunpack.c.h.b16 %v110
    %v394 = vunpack.c.l.b16 %v111
    %v395 = vunpack.c.h.b16 %v111
    %v396 = vpack.c.b16 %v388, %v380
    %v397 = vpack.c.b16 %v389, %v381
    %v398 = vpack.c.b16 %v390, %v382
    %v399 = vpack.c.b16 %v391, %v383
    %v400 = vpack.c.b16 %v392, %v384
    %v401 = vpack.c.b16 %v393, %v385
    %v402 = vpack.c.b16 %v394, %v386
    %v403 = vpack.c.b16 %v395, %v387
    %v661 = vunpack.c.l.b16 %v112
    %v662 = vunpack.c.h.b16 %v112
    %v663 = vunpack.c.l.b16 %v113
    %v664 = vunpack.c.h.b16 %v113
    %v665 = vunpack.c.l.b16 %v114
    %v666 = vunpack.c.h.b16 %v114
    %v667 = vunpack.c.l.b16 %v115
    %v668 = vunpack.c.h.b16 %v115
    %v669 = vunpack.c.l.b16 %v116
    %v670 = vunpack.c.h.b16 %v116
    %v671 = vunpack.c.l.b16 %v117
    %v672 = vunpack.c.h.b16 %v117
    %v673 = vunpack.c.l.b16 %v118
    %v674 = vunpack.c.h.b16 %v118
    %v675 = vunpack.c.l.b16 %v119
    %v676 = vunpack.c.h.b16 %v119
    %v677 = vunpack.c.l.b16 %v120
    %v678 = vunpack.c.h.b16 %v120
    %v679 = vunpack.c.l.b16 %v121
    %v680 = vunpack.c.h.b16 %v121
    %v681 = vunpack.c.l.b16 %v122
    %v682 = vunpack.c.h.b16 %v122
    %v683 = vunpack.c.l.b16 %v123
    %v684 = vunpack.c.h.b16 %v123
    %v685 = vunpack.c.l.b16 %v124
    %v686 = vunpack.c.h.b16 %v124
    %v687 = vunpack.c.l.b16 %v125
    %v688 = vunpack.c.h.b16 %v125
    %v689 = vunpack.c.l.b16 %v126
    %v690 = vunpack.c.h.b16 %v126
    %v691 = vunpack.c.l.b16 %v127
    %v692 = vunpack.c.h.b16 %v127
    %v693 = vunpack.c.l.b16 %v128
    %v694 = vunpack.c.h.b16 %v128
    %v695 = vunpack.c.l.b16 %v129
    %v696 = vunpack.c.h.b16 %v129
    %v697 = vunpack.c.l.b16 %v130
    %v698 = vunpack.c.h.b16 %v130
    %v699 = vunpack.c.l.b16 %v131
    %v700 = vunpack.c.h.b16 %v131
    %v701 = vunpack.c.l.b16 %v132
    %v702 = vunpack.c.h.b16 %v132
    %v703 = vunpack.c.l.b16 %v133
    %v704 = vunpack.c.h.b16 %v133
    %v705 = vunpack.c.l.b16 %v134
    %v706 = vunpack.c.h.b16 %v134
    %v707 = vunpack.c.l.b16 %v135
    %v708 = vunpack.c.h.b16 %v135
    %v709 = vunpack.c.l.b16 %v136
    %v710 = vunpack.c.h.b16 %v136
    %v711 = vunpack.c.l.b16 %v137
    %v712 = vunpack.c.h.b16 %v137
    %v713 = vunpack.c.l.b16 %v138
    %v714 = vunpack.c.h.b16 %v138
    %v715 = vunpack.c.l.b16 %v139
    %v716 = vunpack.c.h.b16 %v139
    %v717 = vunpack.c.l.b16 %v140
    %v718 = vunpack.c.h.b16 %v140
    %v719 = vunpack.c.l.b16 %v141
    %v720 = vunpack.c.h.b16 %v141
    %v721 = vunpack.c.l.b16 %v142
    %v722 = vunpack.c.h.b16 %v142
    %v723 = vunpack.c.l.b16 %v143
    %v724 = vunpack.c.h.b16 %v143
    %v725 = vunpack.c.l.b16 %v144
    %v726 = vunpack.c.h.b16 %v144
    %v727 = vunpack.c.l.b16 %v145
    %v728 = vunpack.c.h.b16 %v145
    %v729 = vunpack.c.l.b16 %v146
    %v730 = vunpack.c.h.b16 %v146
    %v731 = vunpack.c.l.b16 %v147
    %v732 = vunpack.c.h.b16 %v147
    %v733 = vunpack.c.l.b16 %v148
    %v734 = vunpack.c.h.b16 %v148
    %v735 = vunpack.c.l.b16 %v149
    %v736 = vunpack.c.h.b16 %v149
    %v737 = vunpack.c.l.b16 %v150
    %v738 = vunpack.c.h.b16 %v150
    %v739 = vunpack.c.l.b16 %v151
    %v740 = vunpack.c.h.b16 %v151
    %v741 = vunpack.c.l.b16 %v152
    %v742 = vunpack.c.h.b16 %v152
    %v743 = vunpack.c.l.b16 %v153
    %v744 = vunpack.c.h.b16 %v153
    %v745 = vunpack.c.l.b16 %v154
    %v746 = vunpack.c.h.b16 %v154
    %v747 = vunpack.c.l.b16 %v155
    %v748 = vunpack.c.h.b16 %v155
    %v749 = vunpack.c.l.b16 %v156
    %v750 = vunpack.c.h.b16 %v156
    %v751 = vunpack.c.l.b16 %v157
    %v752 = vunpack.c.h.b16 %v157
    %v753 = vunpack.c.l.b16 %v158
    %v754 = vunpack.c.h.b16 %v158
    %v755 = vunpack.c.l.b16 %v159
    %v756 = vunpack.c.h.b16 %v159
    %v757 = vunpack.c.l.b16 %v160
    %v758 = vunpack.c.h.b16 %v160
    %v759 = vunpack.c.l.b16 %v161
    %v760 = vunpack.c.h.b16 %v161
    %v761 = vunpack.c.l.b16 %v162
    %v762 = vunpack.c.h.b16 %v162
    %v763 = vunpack.c.l.b16 %v163
    %v764 = vunpack.c.h.b16 %v163
    %v765 = vunpack.c.l.b16 %v164
    %v766 = vunpack.c.h.b16 %v164
    %v767 = vunpack.c.l.b16 %v165
    %v768 = vunpack.c.h.b16 %v165
    %v769 = vunpack.c.l.b16 %v166
    %v770 = vunpack.c.h.b16 %v166
    %v771 = vunpack.c.l.b16 %v167
    %v772 = vunpack.c.h.b16 %v167
    %v773 = vunpack.c.l.b16 %v168
    %v774 = vunpack.c.h.b16 %v168
    %v775 = vunpack.c.l.b16 %v169
    %v776 = vunpack.c.h.b16 %v169
    %v777 = vunpack.c.l.b16 %v170
    %v778 = vunpack.c.h.b16 %v170
    %v779 = vunpack.c.l.b16 %v171
    %v780 = vunpack.c.h.b16 %v171
    %v781 = vunpack.c.l.b16 %v172
    %v782 = vunpack.c.h.b16 %v172
    %v783 = vunpack.c.l.b16 %v173
    %v784 = vunpack.c.h.b16 %v173
    %v785 = vunpack.c.l.b16 %v174
    %v786 = vunpack.c.h.b16 %v174
    %v787 = vunpack.c.l.b16 %v175
    %v788 = vunpack.c.h.b16 %v175
    %v789 = vunpack.c.l.b16 %v176
    %v790 = vunpack.c.h.b16 %v176
    %v791 = vunpack.c.l.b16 %v177
    %v792 = vunpack.c.h.b16 %v177
    %v793 = vunpack.c.l.b16 %v178
    %v794 = vunpack.c.h.b16 %v178
    %v795 = vunpack.c.l.b16 %v179
    %v796 = vunpack.c.h.b16 %v179
    %v797 = vunpack.c.l.b16 %v180
    %v798 = vunpack.c.h.b16 %v180
    %v799 = vunpack.c.l.b16 %v181
    %v800 = vunpack.c.h.b16 %v181
    %v801 = vunpack.c.l.b16 %v182
    %v802 = vunpack.c.h.b16 %v182
    %v803 = vunpack.c.l.b16 %v183
    %v804 = vunpack.c.h.b16 %v183
    %v805 = vunpack.c.l.b16 %v184
    %v806 = vunpack.c.h.b16 %v184
    %v807 = vunpack.c.l.b16 %v185
    %v808 = vunpack.c.h.b16 %v185
    %v809 = vunpack.c.l.b16 %v186
    %v810 = vunpack.c.h.b16 %v186
    %v811 = vunpack.c.l.b16 %v187
    %v812 = vunpack.c.h.b16 %v187
    %v813 = vunpack.c.l.b16 %v188
    %v814 = vunpack.c.h.b16 %v188
    %v815 = vunpack.c.l.b16 %v189
    %v816 = vunpack.c.h.b16 %v189
    %v817 = vunpack.c.l.b16 %v190
    %v818 = vunpack.c.h.b16 %v190
    %v819 = vunpack.c.l.b16 %v191
    %v820 = vunpack.c.h.b16 %v191
    %v821 = vunpack.c.l.b16 %v192
    %v822 = vunpack.c.h.b16 %v192
    %v823 = vunpack.c.l.b16 %v193
    %v824 = vunpack.c.h.b16 %v193
    %v825 = vunpack.c.l.b16 %v194
    %v826 = vunpack.c.h.b16 %v194
    %v827 = vunpack.c.l.b16 %v195
    %v828 = vunpack.c.h.b16 %v195
    %v829 = vunpack.c.l.b16 %v196
    %v830 = vunpack.c.h.b16 %v196
    %v831 = vunpack.c.l.b16 %v197
    %v832 = vunpack.c.h.b16 %v197
    %v833 = vunpack.c.l.b16 %v198
    %v834 = vunpack.c.h.b16 %v198
    %v835 = vunpack.c.l.b16 %v199
    %v836 = vunpack.c.h.b16 %v199
    %v837 = vunpack.c.l.b16 %v200
    %v838 = vunpack.c.h.b16 %v200
    %v839 = vunpack.c.l.b16 %v201
    %v840 = vunpack.c.h.b16 %v201
    %v841 = vunpack.c.l.b16 %v202
    %v842 = vunpack.c.h.b16 %v202
    %v843 = vunpack.c.l.b16 %v203
    %v844 = vunpack.c.h.b16 %v203
    %v845 = vunpack.c.l.b16 %v204
    %v846 = vunpack.c.h.b16 %v204
    %v847 = vunpack.c.l.b16 %v205
    %v848 = vunpack.c.h.b16 %v205
    %v849 = vunpack.c.l.b16 %v206
    %v850 = vunpack.c.h.b16 %v206
    %v851 = vunpack.c.l.b16 %v207
    %v852 = vunpack.c.h.b16 %v207
    %v853 = vunpack.c.l.b16 %v208
    %v854 = vunpack.c.h.b16 %v208
    %v855 = vunpack.c.l.b16 %v209
    %v856 = vunpack.c.h.b16 %v209
    %v857 = vunpack.c.l.b16 %v210
    %v858 = vunpack.c.h.b16 %v210
    %v859 = vunpack.c.l.b16 %v211
    %v860 = vunpack.c.h.b16 %v211
    %v861 = vunpack.c.l.b16 %v212
    %v862 = vunpack.c.h.b16 %v212
    %v863 = vunpack.c.l.b16 %v213
    %v864 = vunpack.c.h.b16 %v213
    %v865 = vunpack.c.l.b16 %v214
    %v866 = vunpack.c.h.b16 %v214
    %v867 = vunpack.c.l.b16 %v215
    %v868 = vunpack.c.h.b16 %v215
    %v869 = vunpack.c.l.b16 %v216
    %v870 = vunpack.c.h.b16 %v216
    %v871 = vunpack.c.l.b16 %v217
    %v872 = vunpack.c.h.b16 %v217
    %v873 = vunpack.c.l.b16 %v218
    %v874 = vunpack.c.h.b16 %v218
    %v875 = vunpack.c.l.b16 %v219
    %v876 = vunpack.c.h.b16 %v219
    %v877 = vunpack.c.l.b16 %v220
    %v878 = vunpack.c.h.b16 %v220
    %v879 = vunpack.c.l.b16 %v221
    %v880 = vunpack.c.h.b16 %v221
    %v881 = vunpack.c.l.b16 %v222
    %v882 = vunpack.c.h.b16 %v222
    %v883 = vunpack.c.l.b16 %v223
    %v884 = vunpack.c.h.b16 %v223
    %v885 = vunpack.c.l.b16 %v224
    %v886 = vunpack.c.h.b16 %v224
    %v887 = vunpack.c.l.b16 %v225
    %v888 = vunpack.c.h.b16 %v225
    %v889 = vunpack.c.l.b16 %v226
    %v890 = vunpack.c.h.b16 %v226
    %v891 = vunpack.c.l.b16 %v227
    %v892 = vunpack.c.h.b16 %v227
    %v893 = vunpack.c.l.b16 %v228
    %v894 = vunpack.c.h.b16 %v228
    %v895 = vunpack.c.l.b16 %v229
    %v896 = vunpack.c.h.b16 %v229
    %v897 = vunpack.c.l.b16 %v230
    %v898 = vunpack.c.h.b16 %v230
    %v899 = vunpack.c.l.b16 %v231
    %v900 = vunpack.c.h.b16 %v231
    %v901 = vunpack.c.l.b16 %v232
    %v902 = vunpack.c.h.b16 %v232
    %v903 = vunpack.c.l.b16 %v233
    %v904 = vunpack.c.h.b16 %v233
    %v905 = vunpack.c.l.b16 %v234
    %v906 = vunpack.c.h.b16 %v234
    %v907 = vunpack.c.l.b16 %v235
    %v908 = vunpack.c.h.b16 %v235
    %v909 = vunpack.c.l.b16 %v236
    %v910 = vunpack.c.h.b16 %v236
    %v911 = vunpack.c.l.b16 %v237
    %v912 = vunpack.c.h.b16 %v237
    %v913 = vunpack.c.l.b16 %v238
    %v914 = vunpack.c.h.b16 %v238
    %v915 = vunpack.c.l.b16 %v239
    %v916 = vunpack.c.h.b16 %v239
    %v917 = vunpack.c.l.b16 %v240
    %v918 = vunpack.c.h.b16 %v240
    %v919 = vunpack.c.l.b16 %v241
    %v920 = vunpack.c.h.b16 %v241
    %v921 = vunpack.c.l.b16 %v242
    %v922 = vunpack.c.h.b16 %v242
    %v923 = vunpack.c.l.b16 %v243
    %v924 = vunpack.c.h.b16 %v243
    %v925 = vunpack.c.l.b16 %v244
    %v926 = vunpack.c.h.b16 %v244
    %v927 = vunpack.c.l.b16 %v245
    %v928 = vunpack.c.h.b16 %v245
    %v929 = vunpack.c.l.b16 %v246
    %v930 = vunpack.c.h.b16 %v246
    %v931 = vunpack.c.l.b16 %v247
    %v932 = vunpack.c.h.b16 %v247
    %v933 = vunpack.c.l.b16 %v248
    %v934 = vunpack.c.h.b16 %v248
    %v935 = vunpack.c.l.b16 %v249
    %v936 = vunpack.c.h.b16 %v249
    %v937 = vunpack.c.l.b16 %v250
    %v938 = vunpack.c.h.b16 %v250
    %v939 = vunpack.c.l.b16 %v251
    %v940 = vunpack.c.h.b16 %v251
    %v941 = vunpack.c.l.b16 %v252
    %v942 = vunpack.c.h.b16 %v252
    %v943 = vunpack.c.l.b16 %v253
    %v944 = vunpack.c.h.b16 %v253
    %v945 = vunpack.c.l.b16 %v254
    %v946 = vunpack.c.h.b16 %v254
    %v947 = vunpack.c.l.b16 %v255
    %v948 = vunpack.c.h.b16 %v255
    %v949 = vunpack.c.l.b16 %v256
    %v950 = vunpack.c.h.b16 %v256
    %v951 = vunpack.c.l.b16 %v257
    %v952 = vunpack.c.h.b16 %v257
    %v953 = vunpack.c.l.b16 %v258
    %v954 = vunpack.c.h.b16 %v258
    %v955 = vunpack.c.l.b16 %v259
    %v956 = vunpack.c.h.b16 %v259
    %v957 = vunpack.c.l.b16 %v260
    %v958 = vunpack.c.h.b16 %v260
    %v959 = vunpack.c.l.b16 %v261
    %v960 = vunpack.c.h.b16 %v261
    %v961 = vunpack.c.l.b16 %v262
    %v962 = vunpack.c.h.b16 %v262
    %v963 = vunpack.c.l.b16 %v263
    %v964 = vunpack.c.h.b16 %v263
    %v965 = vunpack.c.l.b16 %v264
    %v966 = vunpack.c.h.b16 %v264
    %v967 = vunpack.c.l.b16 %v265
    %v968 = vunpack.c.h.b16 %v265
    %v969 = vunpack.c.l.b16 %v266
    %v970 = vunpack.c.h.b16 %v266
    %v971 = vunpack.c.l.b16 %v267
    %v972 = vunpack.c.h.b16 %v267
    %v973 = vunpack.c.l.b16 %v268
    %v974 = vunpack.c.h.b16 %v268
    %v975 = vunpack.c.l.b16 %v269
    %v976 = vunpack.c.h.b16 %v269
    %v977 = vunpack.c.l.b16 %v270
    %v978 = vunpack.c.h.b16 %v270
    %v979 = vunpack.c.l.b16 %v271
    %v980 = vunpack.c.h.b16 %v271
    %v981 = vunpack.c.l.b16 %v272
    %v982 = vunpack.c.h.b16 %v272
    %v983 = vunpack.c.l.b16 %v273
    %v984 = vunpack.c.h.b16 %v273
    %v985 = vunpack.c.l.b16 %v274
    %v986 = vunpack.c.h.b16 %v274
    %v987 = vunpack.c.l.b16 %v275
    %v988 = vunpack.c.h.b16 %v275
    %v989 = vunpack.c.l.b16 %v276
    %v990 = vunpack.c.h.b16 %v276
    %v991 = vunpack.c.l.b16 %v277
    %v992 = vunpack.c.h.b16 %v277
    %v993 = vunpack.c.l.b16 %v278
    %v994 = vunpack.c.h.b16 %v278
    %v995 = vunpack.c.l.b16 %v279
    %v996 = vunpack.c.h.b16 %v279
    %v997 = vunpack.c.l.b16 %v280
    %v998 = vunpack.c.h.b16 %v280
    %v999 = vunpack.c.l.b16 %v281
    %v1000 = vunpack.c.h.b16 %v281
    %v1001 = vunpack.c.l.b16 %v282
    %v1002 = vunpack.c.h.b16 %v282
    %v1003 = vunpack.c.l.b16 %v283
    %v1004 = vunpack.c.h.b16 %v283
    %v1005 = vunpack.c.l.b16 %v284
    %v1006 = vunpack.c.h.b16 %v284
    %v1007 = vunpack.c.l.b16 %v285
    %v1008 = vunpack.c.h.b16 %v285
    %v1009 = vunpack.c.l.b16 %v286
    %v1010 = vunpack.c.h.b16 %v286
    %v1011 = vunpack.c.l.b16 %v287
    %v1012 = vunpack.c.h.b16 %v287
    %v1013 = vunpack.c.l.b16 %v288
    %v1014 = vunpack.c.h.b16 %v288
    %v1015 = vunpack.c.l.b16 %v289
    %v1016 = vunpack.c.h.b16 %v289
    %v1017 = vunpack.c.l.b16 %v290
    %v1018 = vunpack.c.h.b16 %v290
    %v1019 = vunpack.c.l.b16 %v291
    %v1020 = vunpack.c.h.b16 %v291
    %v1021 = vunpack.c.l.b16 %v292
    %v1022 = vunpack.c.h.b16 %v292
    %v1023 = vunpack.c.l.b16 %v293
    %v1024 = vunpack.c.h.b16 %v293
    %v1025 = vunpack.c.l.b16 %v294
    %v1026 = vunpack.c.h.b16 %v294
    %v1027 = vunpack.c.l.b16 %v295
    %v1028 = vunpack.c.h.b16 %v295
    %v1029 = vunpack.c.l.b16 %v296
    %v1030 = vunpack.c.h.b16 %v296
    %v1031 = vunpack.c.l.b16 %v297
    %v1032 = vunpack.c.h.b16 %v297
    %v1033 = vunpack.c.l.b16 %v298
    %v1034 = vunpack.c.h.b16 %v298
    %v1035 = vunpack.c.l.b16 %v299
    %v1036 = vunpack.c.h.b16 %v299
    %v1037 = vunpack.c.l.b16 %v300
    %v1038 = vunpack.c.h.b16 %v300
    %v1039 = vunpack.c.l.b16 %v301
    %v1040 = vunpack.c.h.b16 %v301
    %v1041 = vunpack.c.l.b16 %v302
    %v1042 = vunpack.c.h.b16 %v302
    %v1043 = vunpack.c.l.b16 %v303
    %v1044 = vunpack.c.h.b16 %v303
    %v1045 = vunpack.c.l.b16 %v304
    %v1046 = vunpack.c.h.b16 %v304
    %v1047 = vunpack.c.l.b16 %v305
    %v1048 = vunpack.c.h.b16 %v305
    %v1049 = vunpack.c.l.b16 %v306
    %v1050 = vunpack.c.h.b16 %v306
    %v1051 = vunpack.c.l.b16 %v307
    %v1052 = vunpack.c.h.b16 %v307
    %v1053 = vunpack.c.l.b16 %v308
    %v1054 = vunpack.c.h.b16 %v308
    %v1055 = vunpack.c.l.b16 %v309
    %v1056 = vunpack.c.h.b16 %v309
    %v1057 = vunpack.c.l.b16 %v310
    %v1058 = vunpack.c.h.b16 %v310
    %v1059 = vunpack.c.l.b16 %v311
    %v1060 = vunpack.c.h.b16 %v311
    %v1061 = vunpack.c.l.b16 %v312
    %v1062 = vunpack.c.h.b16 %v312
    %v1063 = vunpack.c.l.b16 %v313
    %v1064 = vunpack.c.h.b16 %v313
    %v1065 = vunpack.c.l.b16 %v314
    %v1066 = vunpack.c.h.b16 %v314
    %v1067 = vunpack.c.l.b16 %v315
    %v1068 = vunpack.c.h.b16 %v315
    %v1069 = vunpack.c.l.b16 %v316
    %v1070 = vunpack.c.h.b16 %v316
    %v1071 = vunpack.c.l.b16 %v317
    %v1072 = vunpack.c.h.b16 %v317
    %v1073 = vunpack.c.l.b16 %v318
    %v1074 = vunpack.c.h.b16 %v318
    %v1075 = vunpack.c.l.b16 %v319
    %v1076 = vunpack.c.h.b16 %v319
    %v1077 = vunpack.c.l.b16 %v320
    %v1078 = vunpack.c.h.b16 %v320
    %v1079 = vunpack.c.l.b16 %v321
    %v1080 = vunpack.c.h.b16 %v321
    %v1081 = vunpack.c.l.b16 %v322
    %v1082 = vunpack.c.h.b16 %v322
    %v1083 = vunpack.c.l.b16 %v323
    %v1084 = vunpack.c.h.b16 %v323
    %v1085 = vunpack.c.l.b16 %v324
    %v1086 = vunpack.c.h.b16 %v324
    %v1087 = vunpack.c.l.b16 %v325
    %v1088 = vunpack.c.h.b16 %v325
    %v1089 = vunpack.c.l.b16 %v326
    %v1090 = vunpack.c.h.b16 %v326
    %v1091 = vunpack.c.l.b16 %v327
    %v1092 = vunpack.c.h.b16 %v327
    %v1093 = vunpack.c.l.b16 %v328
    %v1094 = vunpack.c.h.b16 %v328
    %v1095 = vunpack.c.l.b16 %v329
    %v1096 = vunpack.c.h.b16 %v329
    %v1097 = vunpack.c.l.b16 %v330
    %v1098 = vunpack.c.h.b16 %v330
    %v1099 = vunpack.c.l.b16 %v331
    %v1100 = vunpack.c.h.b16 %v331
    %v1101 = vunpack.c.l.b16 %v332
    %v1102 = vunpack.c.h.b16 %v332
    %v1103 = vunpack.c.l.b16 %v333
    %v1104 = vunpack.c.h.b16 %v333
    %v1105 = vunpack.c.l.b16 %v334
    %v1106 = vunpack.c.h.b16 %v334
    %v1107 = vunpack.c.l.b16 %v335
    %v1108 = vunpack.c.h.b16 %v335
    %v1109 = vunpack.c.l.b16 %v336
    %v1110 = vunpack.c.h.b16 %v336
    %v1111 = vunpack.c.l.b16 %v337
    %v1112 = vunpack.c.h.b16 %v337
    %v1113 = vunpack.c.l.b16 %v338
    %v1114 = vunpack.c.h.b16 %v338
    %v1115 = vunpack.c.l.b16 %v339
    %v1116 = vunpack.c.h.b16 %v339
    %v1117 = vunpack.c.l.b16 %v340
    %v1118 = vunpack.c.h.b16 %v340
    %v1119 = vunpack.c.l.b16 %v341
    %v1120 = vunpack.c.h.b16 %v341
    %v1121 = vunpack.c.l.b16 %v342
    %v1122 = vunpack.c.h.b16 %v342
    %v1123 = vunpack.c.l.b16 %v343
    %v1124 = vunpack.c.h.b16 %v343
    %v1125 = vunpack.c.l.b16 %v344
    %v1126 = vunpack.c.h.b16 %v344
    %v1127 = vunpack.c.l.b16 %v345
    %v1128 = vunpack.c.h.b16 %v345
    %v1129 = vunpack.c.l.b16 %v346
    %v1130 = vunpack.c.h.b16 %v346
    %v1131 = vunpack.c.l.b16 %v347
    %v1132 = vunpack.c.h.b16 %v347
    %v1133 = vunpack.c.l.b16 %v348
    %v1134 = vunpack.c.h.b16 %v348
    %v1135 = vunpack.c.l.b16 %v349
    %v1136 = vunpack.c.h.b16 %v349
    %v1137 = vunpack.c.l.b16 %v350
    %v1138 = vunpack.c.h.b16 %v350
    %v1139 = vunpack.c.l.b16 %v351
    %v1140 = vunpack.c.h.b16 %v351
    %v1141 = vunpack.c.l.b16 %v352
    %v1142 = vunpack.c.h.b16 %v352
    %v1143 = vunpack.c.l.b16 %v353
    %v1144 = vunpack.c.h.b16 %v353
    %v1145 = vunpack.c.l.b16 %v354
    %v1146 = vunpack.c.h.b16 %v354
    %v1147 = vunpack.c.l.b16 %v355
    %v1148 = vunpack.c.h.b16 %v355
    %v1149 = vunpack.c.l.b16 %v356
    %v1150 = vunpack.c.h.b16 %v356
    %v1151 = vunpack.c.l.b16 %v357
    %v1152 = vunpack.c.h.b16 %v357
    %v1153 = vunpack.c.l.b16 %v358
    %v1154 = vunpack.c.h.b16 %v358
    %v1155 = vunpack.c.l.b16 %v359
    %v1156 = vunpack.c.h.b16 %v359
    %v1157 = vunpack.c.l.b16 %v360
    %v1158 = vunpack.c.h.b16 %v360
    %v1159 = vunpack.c.l.b16 %v361
    %v1160 = vunpack.c.h.b16 %v361
    %v1161 = vpack.c.b16 %v665, %v661
    %v1162 = vpack.c.b16 %v666, %v662
    %v1163 = vpack.c.b16 %v667, %v663
    %v1164 = vpack.c.b16 %v668, %v664
    %v1165 = vpack.c.b16 %v673, %v669
    %v1166 = vpack.c.b16 %v674, %v670
    %v1167 = vpack.c.b16 %v675, %v671
    %v1168 = vpack.c.b16 %v676, %v672
    %v1169 = vpack.c.b16 %v681, %v677
    %v1170 = vpack.c.b16 %v682, %v678
    %v1171 = vpack.c.b16 %v683, %v679
    %v1172 = vpack.c.b16 %v684, %v680
    %v1173 = vpack.c.b16 %v689, %v685
    %v1174 = vpack.c.b16 %v690, %v686
    %v1175 = vpack.c.b16 %v691, %v687
    %v1176 = vpack.c.b16 %v692, %v688
    %v1177 = vpack.c.b16 %v697, %v693
    %v1178 = vpack.c.b16 %v698, %v694
    %v1179 = vpack.c.b16 %v699, %v695
    %v1180 = vpack.c.b16 %v700, %v696
    %v1181 = vpack.c.b16 %v705, %v701
    %v1182 = vpack.c.b16 %v706, %v702
    %v1183 = vpack.c.b16 %v707, %v703
    %v1184 = vpack.c.b16 %v708, %v704
    %v1185 = vpack.c.b16 %v713, %v709
    %v1186 = vpack.c.b16 %v714, %v710
    %v1187 = vpack.c.b16 %v715, %v711
    %v1188 = vpack.c.b16 %v716, %v712
    %v1189 = vpack.c.b16 %v721, %v717
    %v1190 = vpack.c.b16 %v722, %v718
    %v1191 = vpack.c.b16 %v723, %v719
    %v1192 = vpack.c.b16 %v724, %v720
    %v1193 = vpack.c.b16 %v729, %v725
    %v1194 = vpack.c.b16 %v730, %v726
    %v1195 = vpack.c.b16 %v731, %v727
    %v1196 = vpack.c.b16 %v732, %v728
    %v1197 = vpack.c.b16 %v737, %v733
    %v1198 = vpack.c.b16 %v738, %v734
    %v1199 = vpack.c.b16 %v739, %v735
    %v1200 = vpack.c.b16 %v740, %v736
    %v1201 = vpack.c.b16 %v745, %v741
    %v1202 = vpack.c.b16 %v746, %v742
    %v1203 = vpack.c.b16 %v747, %v743
    %v1204 = vpack.c.b16 %v748, %v744
    %v1205 = vpack.c.b16 %v753, %v749
    %v1206 = vpack.c.b16 %v754, %v750
    %v1207 = vpack.c.b16 %v755, %v751
    %v1208 = vpack.c.b16 %v756, %v752
    %v1209 = vpack.c.b16 %v761, %v757
    %v1210 = vpack.c.b16 %v762, %v758
    %v1211 = vpack.c.b16 %v763, %v759
    %v1212 = vpack.c.b16 %v764, %v760
    %v1213 = vpack.c.b16 %v769, %v765
    %v1214 = vpack.c.b16 %v770, %v766
    %v1215 = vpack.c.b16 %v771, %v767
    %v1216 = vpack.c.b16 %v772, %v768
    %v1217 = vpack.c.b16 %v777, %v773
    %v1218 = vpack.c.b16 %v778, %v774
    %v1219 = vpack.c.b16 %v779, %v775
    %v1220 = vpack.c.b16 %v780, %v776
    %v1221 = vpack.c.b16 %v785, %v781
    %v1222 = vpack.c.b16 %v786, %v782
    %v1223 = vpack.c.b16 %v787, %v783
    %v1224 = vpack.c.b16 %v788, %v784
    %v1225 = vpack.c.b16 %v793, %v789
    %v1226 = vpack.c.b16 %v794, %v790
    %v1227 = vpack.c.b16 %v795, %v791
    %v1228 = vpack.c.b16 %v796, %v792
    %v1229 = vpack.c.b16 %v801, %v797
    %v1230 = vpack.c.b16 %v802, %v798
    %v1231 = vpack.c.b16 %v803, %v799
    %v1232 = vpack.c.b16 %v804, %v800
    %v1233 = vpack.c.b16 %v809, %v805
    %v1234 = vpack.c.b16 %v810, %v806
    %v1235 = vpack.c.b16 %v811, %v807
    %v1236 = vpack.c.b16 %v812, %v808
    %v1237 = vpack.c.b16 %v817, %v813
    %v1238 = vpack.c.b16 %v818, %v814
    %v1239 = vpack.c.b16 %v819, %v815
    %v1240 = vpack.c.b16 %v820, %v816
    %v1241 = vpack.c.b16 %v825, %v821
    %v1242 = vpack.c.b16 %v826, %v822
    %v1243 = vpack.c.b16 %v827, %v823
    %v1244 = vpack.c.b16 %v828, %v824
    %v1245 = vpack.c.b16 %v833, %v829
    %v1246 = vpack.c.b16 %v834, %v830
    %v1247 = vpack.c.b16 %v835, %v831
    %v1248 = vpack.c.b16 %v836, %v832
    %v1249 = vpack.c.b16 %v841, %v837
    %v1250 = vpack.c.b16 %v842, %v838
    %v1251 = vpack.c.b16 %v843, %v839
    %v1252 = vpack.c.b16 %v844, %v840
    %v1253 = vpack.c.b16 %v849, %v845
    %v1254 = vpack.c.b16 %v850, %v846
    %v1255 = vpack.c.b16 %v851, %v847
    %v1256 = vpack.c.b16 %v852, %v848
    %v1257 = vpack.c.b16 %v857, %v853
    %v1258 = vpack.c.b16 %v858, %v854
    %v1259 = vpack.c.b16 %v859, %v855
    %v1260 = vpack.c.b16 %v860, %v856
    %v1261 = vpack.c.b16 %v865, %v861
    %v1262 = vpack.c.b16 %v866, %v862
    %v1263 = vpack.c.b16 %v867, %v863
    %v1264 = vpack.c.b16 %v868, %v864
    %v1265 = vpack.c.b16 %v873, %v869
    %v1266 = vpack.c.b16 %v874, %v870
    %v1267 = vpack.c.b16 %v875, %v871
    %v1268 = vpack.c.b16 %v876, %v872
    %v1269 = vpack.c.b16 %v881, %v877
    %v1270 = vpack.c.b16 %v882, %v878
    %v1271 = vpack.c.b16 %v883, %v879
    %v1272 = vpack.c.b16 %v884, %v880
    %v1273 = vpack.c.b16 %v889, %v885
    %v1274 = vpack.c.b16 %v890, %v886
    %v1275 = vpack.c.b16 %v891, %v887
    %v1276 = vpack.c.b16 %v892, %v888
    %v1277 = vpack.c.b16 %v897, %v893
    %v1278 = vpack.c.b16 %v898, %v894
    %v1279 = vpack.c.b16 %v899, %v895
    %v1280 = vpack.c.b16 %v900, %v896
    %v1281 = vpack.c.b16 %v905, %v901
    %v1282 = vpack.c.b16 %v906, %v902
    %v1283 = vpack.c.b16 %v907, %v903
    %v1284 = vpack.c.b16 %v908, %v904
    %v1285 = vpack.c.b16 %v913, %v909
    %v1286 = vpack.c.b16 %v914, %v910
    %v1287 = vpack.c.b16 %v915, %v911
    %v1288 = vpack.c.b16 %v916, %v912
    %v1289 = vpack.c.b16 %v921, %v917
    %v1290 = vpack.c.b16 %v922, %v918
    %v1291 = vpack.c.b16 %v923, %v919
    %v1292 = vpack.c.b16 %v924, %v920
    %v1293 = vpack.c.b16 %v929, %v925
    %v1294 = vpack.c.b16 %v930, %v926
    %v1295 = vpack.c.b16 %v931, %v927
    %v1296 = vpack.c.b16 %v932, %v928
    %v1297 = vpack.c.b16 %v937, %v933
    %v1298 = vpack.c.b16 %v938, %v934
    %v1299 = vpack.c.b16 %v939, %v935
    %v1300 = vpack.c.b16 %v940, %v936
    %v1301 = vpack.c.b16 %v945, %v941
    %v1302 = vpack.c.b16 %v946, %v942
    %v1303 = vpack.c.b16 %v947, %v943
    %v1304 = vpack.c.b16 %v948, %v944
    %v1305 = vpack.c.b16 %v953, %v949
    %v1306 = vpack.c.b16 %v954, %v950
    %v1307 = vpack.c.b16 %v955, %v951
    %v1308 = vpack.c.b16 %v956, %v952
    %v1309 = vpack.c.b16 %v961, %v957
    %v1310 = vpack.c.b16 %v962, %v958
    %v1311 = vpack.c.b16 %v963, %v959
    %v1312 = vpack.c.b16 %v964, %v960
    %v1313 = vpack.c.b16 %v969, %v965
    %v1314 = vpack.c.b16 %v970, %v966
    %v1315 = vpack.c.b16 %v971, %v967
    %v1316 = vpack.c.b16 %v972, %v968
    %v1317 = vpack.c.b16 %v977, %v973
    %v1318 = vpack.c.b16 %v978, %v974
    %v1319 = vpack.c.b16 %v979, %v975
    %v1320 = vpack.c.b16 %v980, %v976
    %v1321 = vpack.c.b16 %v985, %v981
    %v1322 = vpack.c.b16 %v986, %v982
    %v1323 = vpack.c.b16 %v987, %v983
    %v1324 = vpack.c.b16 %v988, %v984
    %v1325 = vpack.c.b16 %v993, %v989
    %v1326 = vpack.c.b16 %v994, %v990
    %v1327 = vpack.c.b16 %v995, %v991
    %v1328 = vpack.c.b16 %v996, %v992
    %v1329 = vpack.c.b16 %v1001, %v997
    %v1330 = vpack.c.b16 %v1002, %v998
    %v1331 = vpack.c.b16 %v1003, %v999
    %v1332 = vpack.c.b16 %v1004, %v1000
    %v1333 = vpack.c.b16 %v1009, %v1005
    %v1334 = vpack.c.b16 %v1010, %v1006
    %v1335 = vpack.c.b16 %v1011, %v1007
    %v1336 = vpack.c.b16 %v1012, %v1008
    %v1337 = vpack.c.b16 %v1017, %v1013
    %v1338 = vpack.c.b16 %v1018, %v1014
    %v1339 = vpack.c.b16 %v1019, %v1015
    %v1340 = vpack.c.b16 %v1020, %v1016
    %v1341 = vpack.c.b16 %v1025, %v1021
    %v1342 = vpack.c.b16 %v1026, %v1022
    %v1343 = vpack.c.b16 %v1027, %v1023
    %v1344 = vpack.c.b16 %v1028, %v1024
    %v1345 = vpack.c.b16 %v1033, %v1029
    %v1346 = vpack.c.b16 %v1034, %v1030
    %v1347 = vpack.c.b16 %v1035, %v1031
    %v1348 = vpack.c.b16 %v1036, %v1032
    %v1349 = vpack.c.b16 %v1041, %v1037
    %v1350 = vpack.c.b16 %v1042, %v1038
    %v1351 = vpack.c.b16 %v1043, %v1039
    %v1352 = vpack.c.b16 %v1044, %v1040
    %v1353 = vpack.c.b16 %v1049, %v1045
    %v1354 = vpack.c.b16 %v1050, %v1046
    %v1355 = vpack.c.b16 %v1051, %v1047
    %v1356 = vpack.c.b16 %v1052, %v1048
    %v1357 = vpack.c.b16 %v1057, %v1053
    %v1358 = vpack.c.b16 %v1058, %v1054
    %v1359 = vpack.c.b16 %v1059, %v1055
    %v1360 = vpack.c.b16 %v1060, %v1056
    %v1361 = vpack.c.b16 %v1065, %v1061
    %v1362 = vpack.c.b16 %v1066, %v1062
    %v1363 = vpack.c.b16 %v1067, %v1063
    %v1364 = vpack.c.b16 %v1068, %v1064
    %v1365 = vpack.c.b16 %v1073, %v1069
    %v1366 = vpack.c.b16 %v1074, %v1070
    %v1367 = vpack.c.b16 %v1075, %v1071
    %v1368 = vpack.c.b16 %v1076, %v1072
    %v1369 = vpack.c.b16 %v1081, %v1077
    %v1370 = vpack.c.b16 %v1082, %v1078
    %v1371 = vpack.c.b16 %v1083, %v1079
    %v1372 = vpack.c.b16 %v1084, %v1080
    %v1373 = vpack.c.b16 %v1089, %v1085
    %v1374 = vpack.c.b16 %v1090, %v1086
    %v1375 = vpack.c.b16 %v1091, %v1087
    %v1376 = vpack.c.b16 %v1092, %v1088
    %v1377 = vpack.c.b16 %v1097, %v1093
    %v1378 = vpack.c.b16 %v1098, %v1094
    %v1379 = vpack.c.b16 %v1099, %v1095
    %v1380 = vpack.c.b16 %v1100, %v1096
    %v1381 = vpack.c.b16 %v1105, %v1101
    %v1382 = vpack.c.b16 %v1106, %v1102
    %v1383 = vpack.c.b16 %v1107, %v1103
    %v1384 = vpack.c.b16 %v1108, %v1104
    %v1385 = vpack.c.b16 %v1113, %v1109
    %v1386 = vpack.c.b16 %v1114, %v1110
    %v1387 = vpack.c.b16 %v1115, %v1111
    %v1388 = vpack.c.b16 %v1116, %v1112
    %v1389 = vpack.c.b16 %v1121, %v1117
    %v1390 = vpack.c.b16 %v1122, %v1118
    %v1391 = vpack.c.b16 %v1123, %v1119
    %v1392 = vpack.c.b16 %v1124, %v1120
    %v1393 = vpack.c.b16 %v1129, %v1125
    %v1394 = vpack.c.b16 %v1130, %v1126
    %v1395 = vpack.c.b16 %v1131, %v1127
    %v1396 = vpack.c.b16 %v1132, %v1128
    %v1397 = vpack.c.b16 %v1137, %v1133
    %v1398 = vpack.c.b16 %v1138, %v1134
    %v1399 = vpack.c.b16 %v1139, %v1135
    %v1400 = vpack.c.b16 %v1140, %v1136
    %v1401 = vpack.c.b16 %v1145, %v1141
    %v1402 = vpack.c.b16 %v1146, %v1142
    %v1403 = vpack.c.b16 %v1147, %v1143
    %v1404 = vpack.c.b16 %v1148, %v1144
    %v1405 = vpack.c.b16 %v1153, %v1149
    %v1406 = vpack.c.b16 %v1154, %v1150
    %v1407 = vpack.c.b16 %v1155, %v1151
    %v1408 = vpack.c.b16 %v1156, %v1152
    %v1409 = vpack.c.b16 %v1157, %v1157
    %v1410 = vpack.c.b16 %v1158, %v1158
    %v1411 = vpack.c.b16 %v1159, %v1159
    %v1412 = vpack.c.b16 %v1160, %v1160
    %vm1661 = vcmask 850944
    %v1663 = vsel %vm1661, %v403, 0
    %vm1665 = vcmask 1043456
    %v1667 = vsel %vm1665, %v1409, 0
    %v1670 = vsel %vm1665, %v1410, 0
    %v1673 = vsel %vm1665, %v1411, 0
    %v1676 = vsel %vm1665, %v1412, 0
    %1678 = vmatpush.bf16.msra.mxu0 %v1189
    %1679 = vmatpush.bf16.msra.mxu0 %v1185
    %1680 = vmatpush.bf16.msra.mxu0 %v1181
    %1681 = vmatpush.bf16.msra.mxu0 %v1177
    %1682 = vmatpush.bf16.msra.mxu0 %v1173
    %1683 = vmatpush.bf16.msra.mxu0 %v1169
    %1684 = vmatpush.bf16.msra.mxu0 %v1165
    %1685 = vmatpush.bf16.msra.mxu0 %v1161
    %1686 = vmatmul.bf16.gmra.mxu0 %v396
    %v1687 = vpop.f32.mrf.mxu0
    %v1688 = vadd.f32 %v364, %v1687
    %v1689 = vpop.f32.mrf.mxu0
    %v1690 = vadd.f32 %v364, %v1689
    %1691 = vdwg.mxu0
    %1692 = vmatpush.bf16.msra.mxu0 %v1221
    %1693 = vmatpush.bf16.msra.mxu0 %v1217
    %1694 = vmatpush.bf16.msra.mxu0 %v1213
    %1695 = vmatpush.bf16.msra.mxu0 %v1209
    %1696 = vmatpush.bf16.msra.mxu0 %v1205
    %1697 = vmatpush.bf16.msra.mxu0 %v1201
    %1698 = vmatpush.bf16.msra.mxu0 %v1197
    %1699 = vmatpush.bf16.msra.mxu0 %v1193
    %1700 = vmatmul.bf16.gmra.mxu0 %v397
    %v1701 = vpop.f32.mrf.mxu0
    %v1702 = vadd.f32 %v1688, %v1701
    %v1703 = vpop.f32.mrf.mxu0
    %v1704 = vadd.f32 %v1690, %v1703
    %1705 = vdwg.mxu0
    %1706 = vmatpush.bf16.msra.mxu0 %v1253
    %1707 = vmatpush.bf16.msra.mxu0 %v1249
    %1708 = vmatpush.bf16.msra.mxu0 %v1245
    %1709 = vmatpush.bf16.msra.mxu0 %v1241
    %1710 = vmatpush.bf16.msra.mxu0 %v1237
    %1711 = vmatpush.bf16.msra.mxu0 %v1233
    %1712 = vmatpush.bf16.msra.mxu0 %v1229
    %1713 = vmatpush.bf16.msra.mxu0 %v1225
    %1714 = vmatmul.bf16.gmra.mxu0 %v398
    %v1715 = vpop.f32.mrf.mxu0
    %v1716 = vadd.f32 %v1702, %v1715
    %v1717 = vpop.f32.mrf.mxu0
    %v1718 = vadd.f32 %v1704, %v1717
    %1719 = vdwg.mxu0
    %1720 = vmatpush.bf16.msra.mxu0 %v1285
    %1721 = vmatpush.bf16.msra.mxu0 %v1281
    %1722 = vmatpush.bf16.msra.mxu0 %v1277
    %1723 = vmatpush.bf16.msra.mxu0 %v1273
    %1724 = vmatpush.bf16.msra.mxu0 %v1269
    %1725 = vmatpush.bf16.msra.mxu0 %v1265
    %1726 = vmatpush.bf16.msra.mxu0 %v1261
    %1727 = vmatpush.bf16.msra.mxu0 %v1257
    %1728 = vmatmul.bf16.gmra.mxu0 %v399
    %v1729 = vpop.f32.mrf.mxu0
    %v1730 = vadd.f32 %v1716, %v1729
    %v1731 = vpop.f32.mrf.mxu0
    %v1732 = vadd.f32 %v1718, %v1731
    %1733 = vdwg.mxu0
    %1734 = vmatpush.bf16.msra.mxu0 %v1317
    %1735 = vmatpush.bf16.msra.mxu0 %v1313
    %1736 = vmatpush.bf16.msra.mxu0 %v1309
    %1737 = vmatpush.bf16.msra.mxu0 %v1305
    %1738 = vmatpush.bf16.msra.mxu0 %v1301
    %1739 = vmatpush.bf16.msra.mxu0 %v1297
    %1740 = vmatpush.bf16.msra.mxu0 %v1293
    %1741 = vmatpush.bf16.msra.mxu0 %v1289
    %1742 = vmatmul.bf16.gmra.mxu0 %v400
    %v1743 = vpop.f32.mrf.mxu0
    %v1744 = vadd.f32 %v1730, %v1743
    %v1745 = vpop.f32.mrf.mxu0
    %v1746 = vadd.f32 %v1732, %v1745
    %1747 = vdwg.mxu0
    %1748 = vmatpush.bf16.msra.mxu0 %v1349
    %1749 = vmatpush.bf16.msra.mxu0 %v1345
    %1750 = vmatpush.bf16.msra.mxu0 %v1341
    %1751 = vmatpush.bf16.msra.mxu0 %v1337
    %1752 = vmatpush.bf16.msra.mxu0 %v1333
    %1753 = vmatpush.bf16.msra.mxu0 %v1329
    %1754 = vmatpush.bf16.msra.mxu0 %v1325
    %1755 = vmatpush.bf16.msra.mxu0 %v1321
    %1756 = vmatmul.bf16.gmra.mxu0 %v401
    %v1757 = vpop.f32.mrf.mxu0
    %v1758 = vadd.f32 %v1744, %v1757
    %v1759 = vpop.f32.mrf.mxu0
    %v1760 = vadd.f32 %v1746, %v1759
    %1761 = vdwg.mxu0
    %1762 = vmatpush.bf16.msra.mxu0 %v1381
    %1763 = vmatpush.bf16.msra.mxu0 %v1377
    %1764 = vmatpush.bf16.msra.mxu0 %v1373
    %1765 = vmatpush.bf16.msra.mxu0 %v1369
    %1766 = vmatpush.bf16.msra.mxu0 %v1365
    %1767 = vmatpush.bf16.msra.mxu0 %v1361
    %1768 = vmatpush.bf16.msra.mxu0 %v1357
    %1769 = vmatpush.bf16.msra.mxu0 %v1353
    %1770 = vmatmul.bf16.gmra.mxu0 %v402
    %v1771 = vpop.f32.mrf.mxu0
    %v1772 = vadd.f32 %v1758, %v1771
    %v1773 = vpop.f32.mrf.mxu0
    %v1774 = vadd.f32 %v1760, %v1773
    %1775 = vdwg.mxu0
    %1776 = vmatpush.bf16.msra.mxu0 0
    %1777 = vmatpush.bf16.msra.mxu0 %v1667
    %1778 = vmatpush.bf16.msra.mxu0 %v1405
    %1779 = vmatpush.bf16.msra.mxu0 %v1401
    %1780 = vmatpush.bf16.msra.mxu0 %v1397
    %1781 = vmatpush.bf16.msra.mxu0 %v1393
    %1782 = vmatpush.bf16.msra.mxu0 %v1389
    %1783 = vmatpush.bf16.msra.mxu0 %v1385
    %1784 = vmatmul.bf16.gmra.mxu0 %v1663
    %v1785 = vpop.f32.mrf.mxu0
    %v1786 = vadd.f32 %v1772, %v1785
    %v1787 = vpop.f32.mrf.mxu0
    %v1788 = vadd.f32 %v1774, %v1787
    %1789 = vdwg.mxu0
    %1790 = vmatpush.bf16.msra.mxu0 %v1190
    %1791 = vmatpush.bf16.msra.mxu0 %v1186
    %1792 = vmatpush.bf16.msra.mxu0 %v1182
    %1793 = vmatpush.bf16.msra.mxu0 %v1178
    %1794 = vmatpush.bf16.msra.mxu0 %v1174
    %1795 = vmatpush.bf16.msra.mxu0 %v1170
    %1796 = vmatpush.bf16.msra.mxu0 %v1166
    %1797 = vmatpush.bf16.msra.mxu0 %v1162
    %1798 = vmatmul.bf16.gmra.mxu0 %v396
    %v1799 = vpop.f32.mrf.mxu0
    %v1800 = vadd.f32 %v365, %v1799
    %v1801 = vpop.f32.mrf.mxu0
    %v1802 = vadd.f32 %v365, %v1801
    %1803 = vdwg.mxu0
    %1804 = vmatpush.bf16.msra.mxu0 %v1222
    %1805 = vmatpush.bf16.msra.mxu0 %v1218
    %1806 = vmatpush.bf16.msra.mxu0 %v1214
    %1807 = vmatpush.bf16.msra.mxu0 %v1210
    %1808 = vmatpush.bf16.msra.mxu0 %v1206
    %1809 = vmatpush.bf16.msra.mxu0 %v1202
    %1810 = vmatpush.bf16.msra.mxu0 %v1198
    %1811 = vmatpush.bf16.msra.mxu0 %v1194
    %1812 = vmatmul.bf16.gmra.mxu0 %v397
    %v1813 = vpop.f32.mrf.mxu0
    %v1814 = vadd.f32 %v1800, %v1813
    %v1815 = vpop.f32.mrf.mxu0
    %v1816 = vadd.f32 %v1802, %v1815
    %1817 = vdwg.mxu0
    %1818 = vmatpush.bf16.msra.mxu0 %v1254
    %1819 = vmatpush.bf16.msra.mxu0 %v1250
    %1820 = vmatpush.bf16.msra.mxu0 %v1246
    %1821 = vmatpush.bf16.msra.mxu0 %v1242
    %1822 = vmatpush.bf16.msra.mxu0 %v1238
    %1823 = vmatpush.bf16.msra.mxu0 %v1234
    %1824 = vmatpush.bf16.msra.mxu0 %v1230
    %1825 = vmatpush.bf16.msra.mxu0 %v1226
    %1826 = vmatmul.bf16.gmra.mxu0 %v398
    %v1827 = vpop.f32.mrf.mxu0
    %v1828 = vadd.f32 %v1814, %v1827
    %v1829 = vpop.f32.mrf.mxu0
    %v1830 = vadd.f32 %v1816, %v1829
    %1831 = vdwg.mxu0
    %1832 = vmatpush.bf16.msra.mxu0 %v1286
    %1833 = vmatpush.bf16.msra.mxu0 %v1282
    %1834 = vmatpush.bf16.msra.mxu0 %v1278
    %1835 = vmatpush.bf16.msra.mxu0 %v1274
    %1836 = vmatpush.bf16.msra.mxu0 %v1270
    %1837 = vmatpush.bf16.msra.mxu0 %v1266
    %1838 = vmatpush.bf16.msra.mxu0 %v1262
    %1839 = vmatpush.bf16.msra.mxu0 %v1258
    %1840 = vmatmul.bf16.gmra.mxu0 %v399
    %v1841 = vpop.f32.mrf.mxu0
    %v1842 = vadd.f32 %v1828, %v1841
    %v1843 = vpop.f32.mrf.mxu0
    %v1844 = vadd.f32 %v1830, %v1843
    %1845 = vdwg.mxu0
    %1846 = vmatpush.bf16.msra.mxu0 %v1318
    %1847 = vmatpush.bf16.msra.mxu0 %v1314
    %1848 = vmatpush.bf16.msra.mxu0 %v1310
    %1849 = vmatpush.bf16.msra.mxu0 %v1306
    %1850 = vmatpush.bf16.msra.mxu0 %v1302
    %1851 = vmatpush.bf16.msra.mxu0 %v1298
    %1852 = vmatpush.bf16.msra.mxu0 %v1294
    %1853 = vmatpush.bf16.msra.mxu0 %v1290
    %1854 = vmatmul.bf16.gmra.mxu0 %v400
    %v1855 = vpop.f32.mrf.mxu0
    %v1856 = vadd.f32 %v1842, %v1855
    %v1857 = vpop.f32.mrf.mxu0
    %v1858 = vadd.f32 %v1844, %v1857
    %1859 = vdwg.mxu0
    %1860 = vmatpush.bf16.msra.mxu0 %v1350
    %1861 = vmatpush.bf16.msra.mxu0 %v1346
    %1862 = vmatpush.bf16.msra.mxu0 %v1342
    %1863 = vmatpush.bf16.msra.mxu0 %v1338
    %1864 = vmatpush.bf16.msra.mxu0 %v1334
    %1865 = vmatpush.bf16.msra.mxu0 %v1330
    %1866 = vmatpush.bf16.msra.mxu0 %v1326
    %1867 = vmatpush.bf16.msra.mxu0 %v1322
    %1868 = vmatmul.bf16.gmra.mxu0 %v401
    %v1869 = vpop.f32.mrf.mxu0
    %v1870 = vadd.f32 %v1856, %v1869
    %v1871 = vpop.f32.mrf.mxu0
    %v1872 = vadd.f32 %v1858, %v1871
    %1873 = vdwg.mxu0
    %1874 = vmatpush.bf16.msra.mxu0 %v1382
    %1875 = vmatpush.bf16.msra.mxu0 %v1378
    %1876 = vmatpush.bf16.msra.mxu0 %v1374
    %1877 = vmatpush.bf16.msra.mxu0 %v1370
    %1878 = vmatpush.bf16.msra.mxu0 %v1366
    %1879 = vmatpush.bf16.msra.mxu0 %v1362
    %1880 = vmatpush.bf16.msra.mxu0 %v1358
    %1881 = vmatpush.bf16.msra.mxu0 %v1354
    %1882 = vmatmul.bf16.gmra.mxu0 %v402
    %v1883 = vpop.f32.mrf.mxu0
    %v1884 = vadd.f32 %v1870, %v1883
    %v1885 = vpop.f32.mrf.mxu0
    %v1886 = vadd.f32 %v1872, %v1885
    %1887 = vdwg.mxu0
    %1888 = vmatpush.bf16.msra.mxu0 0
    %1889 = vmatpush.bf16.msra.mxu0 %v1670
    %1890 = vmatpush.bf16.msra.mxu0 %v1406
    %1891 = vmatpush.bf16.msra.mxu0 %v1402
    %1892 = vmatpush.bf16.msra.mxu0 %v1398
    %1893 = vmatpush.bf16.msra.mxu0 %v1394
    %1894 = vmatpush.bf16.msra.mxu0 %v1390
    %1895 = vmatpush.bf16.msra.mxu0 %v1386
    %1896 = vmatmul.bf16.gmra.mxu0 %v1663
    %v1897 = vpop.f32.mrf.mxu0
    %v1898 = vadd.f32 %v1884, %v1897
    %v1899 = vpop.f32.mrf.mxu0
    %v1900 = vadd.f32 %v1886, %v1899
    %1901 = vdwg.mxu0
    %1902 = vmatpush.bf16.msra.mxu0 %v1191
    %1903 = vmatpush.bf16.msra.mxu0 %v1187
    %1904 = vmatpush.bf16.msra.mxu0 %v1183
    %1905 = vmatpush.bf16.msra.mxu0 %v1179
    %1906 = vmatpush.bf16.msra.mxu0 %v1175
    %1907 = vmatpush.bf16.msra.mxu0 %v1171
    %1908 = vmatpush.bf16.msra.mxu0 %v1167
    %1909 = vmatpush.bf16.msra.mxu0 %v1163
    %1910 = vmatmul.bf16.gmra.mxu0 %v396
    %v1911 = vpop.f32.mrf.mxu0
    %v1912 = vadd.f32 %v366, %v1911
    %v1913 = vpop.f32.mrf.mxu0
    %v1914 = vadd.f32 %v366, %v1913
    %1915 = vdwg.mxu0
    %1916 = vmatpush.bf16.msra.mxu0 %v1223
    %1917 = vmatpush.bf16.msra.mxu0 %v1219
    %1918 = vmatpush.bf16.msra.mxu0 %v1215
    %1919 = vmatpush.bf16.msra.mxu0 %v1211
    %1920 = vmatpush.bf16.msra.mxu0 %v1207
    %1921 = vmatpush.bf16.msra.mxu0 %v1203
    %1922 = vmatpush.bf16.msra.mxu0 %v1199
    %1923 = vmatpush.bf16.msra.mxu0 %v1195
    %1924 = vmatmul.bf16.gmra.mxu0 %v397
    %v1925 = vpop.f32.mrf.mxu0
    %v1926 = vadd.f32 %v1912, %v1925
    %v1927 = vpop.f32.mrf.mxu0
    %v1928 = vadd.f32 %v1914, %v1927
    %1929 = vdwg.mxu0
    %1930 = vmatpush.bf16.msra.mxu0 %v1255
    %1931 = vmatpush.bf16.msra.mxu0 %v1251
    %1932 = vmatpush.bf16.msra.mxu0 %v1247
    %1933 = vmatpush.bf16.msra.mxu0 %v1243
    %1934 = vmatpush.bf16.msra.mxu0 %v1239
    %1935 = vmatpush.bf16.msra.mxu0 %v1235
    %1936 = vmatpush.bf16.msra.mxu0 %v1231
    %1937 = vmatpush.bf16.msra.mxu0 %v1227
    %1938 = vmatmul.bf16.gmra.mxu0 %v398
    %v1939 = vpop.f32.mrf.mxu0
    %v1940 = vadd.f32 %v1926, %v1939
    %v1941 = vpop.f32.mrf.mxu0
    %v1942 = vadd.f32 %v1928, %v1941
    %1943 = vdwg.mxu0
    %1944 = vmatpush.bf16.msra.mxu0 %v1287
    %1945 = vmatpush.bf16.msra.mxu0 %v1283
    %1946 = vmatpush.bf16.msra.mxu0 %v1279
    %1947 = vmatpush.bf16.msra.mxu0 %v1275
    %1948 = vmatpush.bf16.msra.mxu0 %v1271
    %1949 = vmatpush.bf16.msra.mxu0 %v1267
    %1950 = vmatpush.bf16.msra.mxu0 %v1263
    %1951 = vmatpush.bf16.msra.mxu0 %v1259
    %1952 = vmatmul.bf16.gmra.mxu0 %v399
    %v1953 = vpop.f32.mrf.mxu0
    %v1954 = vadd.f32 %v1940, %v1953
    %v1955 = vpop.f32.mrf.mxu0
    %v1956 = vadd.f32 %v1942, %v1955
    %1957 = vdwg.mxu0
    %1958 = vmatpush.bf16.msra.mxu0 %v1319
    %1959 = vmatpush.bf16.msra.mxu0 %v1315
    %1960 = vmatpush.bf16.msra.mxu0 %v1311
    %1961 = vmatpush.bf16.msra.mxu0 %v1307
    %1962 = vmatpush.bf16.msra.mxu0 %v1303
    %1963 = vmatpush.bf16.msra.mxu0 %v1299
    %1964 = vmatpush.bf16.msra.mxu0 %v1295
    %1965 = vmatpush.bf16.msra.mxu0 %v1291
    %1966 = vmatmul.bf16.gmra.mxu0 %v400
    %v1967 = vpop.f32.mrf.mxu0
    %v1968 = vadd.f32 %v1954, %v1967
    %v1969 = vpop.f32.mrf.mxu0
    %v1970 = vadd.f32 %v1956, %v1969
    %1971 = vdwg.mxu0
    %1972 = vmatpush.bf16.msra.mxu0 %v1351
    %1973 = vmatpush.bf16.msra.mxu0 %v1347
    %1974 = vmatpush.bf16.msra.mxu0 %v1343
    %1975 = vmatpush.bf16.msra.mxu0 %v1339
    %1976 = vmatpush.bf16.msra.mxu0 %v1335
    %1977 = vmatpush.bf16.msra.mxu0 %v1331
    %1978 = vmatpush.bf16.msra.mxu0 %v1327
    %1979 = vmatpush.bf16.msra.mxu0 %v1323
    %1980 = vmatmul.bf16.gmra.mxu0 %v401
    %v1981 = vpop.f32.mrf.mxu0
    %v1982 = vadd.f32 %v1968, %v1981
    %v1983 = vpop.f32.mrf.mxu0
    %v1984 = vadd.f32 %v1970, %v1983
    %1985 = vdwg.mxu0
    %1986 = vmatpush.bf16.msra.mxu0 %v1383
    %1987 = vmatpush.bf16.msra.mxu0 %v1379
    %1988 = vmatpush.bf16.msra.mxu0 %v1375
    %1989 = vmatpush.bf16.msra.mxu0 %v1371
    %1990 = vmatpush.bf16.msra.mxu0 %v1367
    %1991 = vmatpush.bf16.msra.mxu0 %v1363
    %1992 = vmatpush.bf16.msra.mxu0 %v1359
    %1993 = vmatpush.bf16.msra.mxu0 %v1355
    %1994 = vmatmul.bf16.gmra.mxu0 %v402
    %v1995 = vpop.f32.mrf.mxu0
    %v1996 = vadd.f32 %v1982, %v1995
    %v1997 = vpop.f32.mrf.mxu0
    %v1998 = vadd.f32 %v1984, %v1997
    %1999 = vdwg.mxu0
    %2000 = vmatpush.bf16.msra.mxu0 0
    %2001 = vmatpush.bf16.msra.mxu0 %v1673
    %2002 = vmatpush.bf16.msra.mxu0 %v1407
    %2003 = vmatpush.bf16.msra.mxu0 %v1403
    %2004 = vmatpush.bf16.msra.mxu0 %v1399
    %2005 = vmatpush.bf16.msra.mxu0 %v1395
    %2006 = vmatpush.bf16.msra.mxu0 %v1391
    %2007 = vmatpush.bf16.msra.mxu0 %v1387
    %2008 = vmatmul.bf16.gmra.mxu0 %v1663
    %v2009 = vpop.f32.mrf.mxu0
    %v2010 = vadd.f32 %v1996, %v2009
    %v2011 = vpop.f32.mrf.mxu0
    %v2012 = vadd.f32 %v1998, %v2011
    %2013 = vdwg.mxu0
    %2014 = vmatpush.bf16.msra.mxu0 %v1192
    %2015 = vmatpush.bf16.msra.mxu0 %v1188
    %2016 = vmatpush.bf16.msra.mxu0 %v1184
    %2017 = vmatpush.bf16.msra.mxu0 %v1180
    %2018 = vmatpush.bf16.msra.mxu0 %v1176
    %2019 = vmatpush.bf16.msra.mxu0 %v1172
    %2020 = vmatpush.bf16.msra.mxu0 %v1168
    %2021 = vmatpush.bf16.msra.mxu0 %v1164
    %2022 = vmatmul.bf16.gmra.mxu0 %v396
    %v2023 = vpop.f32.mrf.mxu0
    %v2024 = vadd.f32 %v367, %v2023
    %v2025 = vpop.f32.mrf.mxu0
    %v2026 = vadd.f32 %v367, %v2025
    %2027 = vdwg.mxu0
    %2028 = vmatpush.bf16.msra.mxu0 %v1224
    %2029 = vmatpush.bf16.msra.mxu0 %v1220
    %2030 = vmatpush.bf16.msra.mxu0 %v1216
    %2031 = vmatpush.bf16.msra.mxu0 %v1212
    %2032 = vmatpush.bf16.msra.mxu0 %v1208
    %2033 = vmatpush.bf16.msra.mxu0 %v1204
    %2034 = vmatpush.bf16.msra.mxu0 %v1200
    %2035 = vmatpush.bf16.msra.mxu0 %v1196
    %2036 = vmatmul.bf16.gmra.mxu0 %v397
    %v2037 = vpop.f32.mrf.mxu0
    %v2038 = vadd.f32 %v2024, %v2037
    %v2039 = vpop.f32.mrf.mxu0
    %v2040 = vadd.f32 %v2026, %v2039
    %2041 = vdwg.mxu0
    %2042 = vmatpush.bf16.msra.mxu0 %v1256
    %2043 = vmatpush.bf16.msra.mxu0 %v1252
    %2044 = vmatpush.bf16.msra.mxu0 %v1248
    %2045 = vmatpush.bf16.msra.mxu0 %v1244
    %2046 = vmatpush.bf16.msra.mxu0 %v1240
    %2047 = vmatpush.bf16.msra.mxu0 %v1236
    %2048 = vmatpush.bf16.msra.mxu0 %v1232
    %2049 = vmatpush.bf16.msra.mxu0 %v1228
    %2050 = vmatmul.bf16.gmra.mxu0 %v398
    %v2051 = vpop.f32.mrf.mxu0
    %v2052 = vadd.f32 %v2038, %v2051
    %v2053 = vpop.f32.mrf.mxu0
    %v2054 = vadd.f32 %v2040, %v2053
    %2055 = vdwg.mxu0
    %2056 = vmatpush.bf16.msra.mxu0 %v1288
    %2057 = vmatpush.bf16.msra.mxu0 %v1284
    %2058 = vmatpush.bf16.msra.mxu0 %v1280
    %2059 = vmatpush.bf16.msra.mxu0 %v1276
    %2060 = vmatpush.bf16.msra.mxu0 %v1272
    %2061 = vmatpush.bf16.msra.mxu0 %v1268
    %2062 = vmatpush.bf16.msra.mxu0 %v1264
    %2063 = vmatpush.bf16.msra.mxu0 %v1260
    %2064 = vmatmul.bf16.gmra.mxu0 %v399
    %v2065 = vpop.f32.mrf.mxu0
    %v2066 = vadd.f32 %v2052, %v2065
    %v2067 = vpop.f32.mrf.mxu0
    %v2068 = vadd.f32 %v2054, %v2067
    %2069 = vdwg.mxu0
    %2070 = vmatpush.bf16.msra.mxu0 %v1320
    %2071 = vmatpush.bf16.msra.mxu0 %v1316
    %2072 = vmatpush.bf16.msra.mxu0 %v1312
    %2073 = vmatpush.bf16.msra.mxu0 %v1308
    %2074 = vmatpush.bf16.msra.mxu0 %v1304
    %2075 = vmatpush.bf16.msra.mxu0 %v1300
    %2076 = vmatpush.bf16.msra.mxu0 %v1296
    %2077 = vmatpush.bf16.msra.mxu0 %v1292
    %2078 = vmatmul.bf16.gmra.mxu0 %v400
    %v2079 = vpop.f32.mrf.mxu0
    %v2080 = vadd.f32 %v2066, %v2079
    %v2081 = vpop.f32.mrf.mxu0
    %v2082 = vadd.f32 %v2068, %v2081
    %2083 = vdwg.mxu0
    %2084 = vmatpush.bf16.msra.mxu0 %v1352
    %2085 = vmatpush.bf16.msra.mxu0 %v1348
    %2086 = vmatpush.bf16.msra.mxu0 %v1344
    %2087 = vmatpush.bf16.msra.mxu0 %v1340
    %2088 = vmatpush.bf16.msra.mxu0 %v1336
    %2089 = vmatpush.bf16.msra.mxu0 %v1332
    %2090 = vmatpush.bf16.msra.mxu0 %v1328
    %2091 = vmatpush.bf16.msra.mxu0 %v1324
    %2092 = vmatmul.bf16.gmra.mxu0 %v401
    %v2093 = vpop.f32.mrf.mxu0
    %v2094 = vadd.f32 %v2080, %v2093
    %v2095 = vpop.f32.mrf.mxu0
    %v2096 = vadd.f32 %v2082, %v2095
    %2097 = vdwg.mxu0
    %2098 = vmatpush.bf16.msra.mxu0 %v1384
    %2099 = vmatpush.bf16.msra.mxu0 %v1380
    %2100 = vmatpush.bf16.msra.mxu0 %v1376
    %2101 = vmatpush.bf16.msra.mxu0 %v1372
    %2102 = vmatpush.bf16.msra.mxu0 %v1368
    %2103 = vmatpush.bf16.msra.mxu0 %v1364
    %2104 = vmatpush.bf16.msra.mxu0 %v1360
    %2105 = vmatpush.bf16.msra.mxu0 %v1356
    %2106 = vmatmul.bf16.gmra.mxu0 %v402
    %v2107 = vpop.f32.mrf.mxu0
    %v2108 = vadd.f32 %v2094, %v2107
    %v2109 = vpop.f32.mrf.mxu0
    %v2110 = vadd.f32 %v2096, %v2109
    %2111 = vdwg.mxu0
    %2112 = vmatpush.bf16.msra.mxu0 0
    %2113 = vmatpush.bf16.msra.mxu0 %v1676
    %2114 = vmatpush.bf16.msra.mxu0 %v1408
    %2115 = vmatpush.bf16.msra.mxu0 %v1404
    %2116 = vmatpush.bf16.msra.mxu0 %v1400
    %2117 = vmatpush.bf16.msra.mxu0 %v1396
    %2118 = vmatpush.bf16.msra.mxu0 %v1392
    %2119 = vmatpush.bf16.msra.mxu0 %v1388
    %2120 = vmatmul.bf16.gmra.mxu0 %v1663
    %v2121 = vpop.f32.mrf.mxu0
    %v2122 = vadd.f32 %v2108, %v2121
    %v2123 = vpop.f32.mrf.mxu0
    %v2124 = vadd.f32 %v2110, %v2123
    %2125 = vdwg.mxu0
    %v2126 = vmax.f32 %v1786, 0.0
    %v2127 = vmax.f32 %v1898, 0.0
    %v2128 = vmax.f32 %v2010, 0.0
    %v2129 = vmax.f32 %v2122, 0.0
    %v2130 = vmax.f32 %v1788, 0.0
    %v2131 = vmax.f32 %v1900, 0.0
    %v2132 = vmax.f32 %v2012, 0.0
    %v2133 = vmax.f32 %v2124, 0.0
    %v2134 = vpack.c.bf16 %v2130, %v2126
    %v2135 = vpack.c.bf16 %v2131, %v2127
    %v2136 = vpack.c.bf16 %v2132, %v2128
    %v2137 = vpack.c.bf16 %v2133, %v2129
    %v2138 = vld [vmem:[#allocation8] sm:$0xf]
    %v2139 = vld [vmem:[#allocation8 + $0x4] sm:$0xf]
    %v2140 = vld [vmem:[#allocation8 + $0x8] sm:$0xf]
    %v2141 = vld [vmem:[#allocation8 + $0xc] sm:$0xf]
    %v2142 = vld [vmem:[#allocation8 + $0x10] sm:$0xf]
    %v2143 = vld [vmem:[#allocation8 + $0x14] sm:$0xf]
    %v2144 = vld [vmem:[#allocation8 + $0x18] sm:$0xf]
    %v2145 = vld [vmem:[#allocation8 + $0x1c] sm:$0xf]
    %v2146 = vld [vmem:[#allocation8 + $0x20] sm:$0xf]
    %v2147 = vld [vmem:[#allocation8 + $0x24] sm:$0xf]
    %v2148 = vld [vmem:[#allocation8 + $0x28] sm:$0xf]
    %v2149 = vld [vmem:[#allocation8 + $0x2c] sm:$0xf]
    %v2150 = vld [vmem:[#allocation8 + $0x30] sm:$0xf]
    %v2151 = vld [vmem:[#allocation8 + $0x34] sm:$0xf]
    %v2152 = vld [vmem:[#allocation8 + $0x38] sm:$0xf]
    %v2153 = vld [vmem:[#allocation8 + $0x3c] sm:$0xf]
    %v2154 = vld [vmem:[#allocation8 + $0x40] sm:$0xf]
    %v2155 = vld [vmem:[#allocation8 + $0x44] sm:$0xf]
    %v2156 = vld [vmem:[#allocation8 + $0x48] sm:$0xf]
    %v2157 = vld [vmem:[#allocation8 + $0x4c] sm:$0xf]
    %v2158 = vld [vmem:[#allocation8 + $0x50] sm:$0xf]
    %v2159 = vld [vmem:[#allocation8 + $0x54] sm:$0xf]
    %v2160 = vld [vmem:[#allocation8 + $0x58] sm:$0xf]
    %v2161 = vld [vmem:[#allocation8 + $0x5c] sm:$0xf]
    %v2162 = vld [vmem:[#allocation8 + $0x60] sm:$0xf]
    %v2163 = vld [vmem:[#allocation8 + $0x64] sm:$0xf]
    %v2164 = vld [vmem:[#allocation8 + $0x68] sm:$0xf]
    %v2165 = vld [vmem:[#allocation8 + $0x6c] sm:$0xf]
    %v2166 = vld [vmem:[#allocation8 + $0x70] sm:$0xf]
    %v2167 = vld [vmem:[#allocation8 + $0x74] sm:$0xf]
    %v2168 = vld [vmem:[#allocation8 + $0x78] sm:$0xf]
    %v2169 = vld [vmem:[#allocation8 + $0x7c] sm:$0xf]
    %v2170 = vld [vmem:[#allocation8 + $0x80] sm:$0xf]
    %v2171 = vld [vmem:[#allocation8 + $0x84] sm:$0xf]
    %v2172 = vld [vmem:[#allocation8 + $0x88] sm:$0xf]
    %v2173 = vld [vmem:[#allocation8 + $0x8c] sm:$0xf]
    %v2174 = vld [vmem:[#allocation8 + $0x90] sm:$0xf]
    %v2175 = vld [vmem:[#allocation8 + $0x94] sm:$0xf]
    %v2176 = vld [vmem:[#allocation8 + $0x98] sm:$0xf]
    %v2177 = vld [vmem:[#allocation8 + $0x9c] sm:$0xf]
    %v2178 = vld [vmem:[#allocation8 + $0xa0] sm:$0xf]
    %v2179 = vld [vmem:[#allocation8 + $0xa4] sm:$0xf]
    %v2180 = vld [vmem:[#allocation8 + $0xa8] sm:$0xf]
    %v2181 = vld [vmem:[#allocation8 + $0xac] sm:$0xf]
    %v2182 = vld [vmem:[#allocation8 + $0xb0] sm:$0xf]
    %v2183 = vld [vmem:[#allocation8 + $0xb4] sm:$0xf]
    %v2184 = vld [vmem:[#allocation8 + $0xb8] sm:$0xf]
    %v2185 = vld [vmem:[#allocation8 + $0xbc] sm:$0xf]
    %v2186 = vld [vmem:[#allocation8 + $0xc0] sm:$0xf]
    %v2187 = vld [vmem:[#allocation8 + $0xc4] sm:$0xf]
    %v2188 = vld [vmem:[#allocation8 + $0xc8] sm:$0xf]
    %v2189 = vld [vmem:[#allocation8 + $0xcc] sm:$0xf]
    %v2190 = vld [vmem:[#allocation8 + $0xd0] sm:$0xf]
    %v2191 = vld [vmem:[#allocation8 + $0xd4] sm:$0xf]
    %v2192 = vld [vmem:[#allocation8 + $0xd8] sm:$0xf]
    %v2193 = vld [vmem:[#allocation8 + $0xdc] sm:$0xf]
    %v2194 = vld [vmem:[#allocation8 + $0xe0] sm:$0xf]
    %v2195 = vld [vmem:[#allocation8 + $0xe4] sm:$0xf]
    %v2196 = vld [vmem:[#allocation8 + $0xe8] sm:$0xf]
    %v2197 = vld [vmem:[#allocation8 + $0xec] sm:$0xf]
    %v2198 = vld [vmem:[#allocation8 + $0xf0] sm:$0xf]
    %v2199 = vld [vmem:[#allocation8 + $0xf4] sm:$0xf]
    %v2200 = vld [vmem:[#allocation8 + $0xf8] sm:$0xf]
    %v2201 = vld [vmem:[#allocation8 + $0xfc] sm:$0xf]
    %v2202 = vld [vmem:[%s4] sm:$0x1]
    %v2204 = vperm.slane %v2202, 0
    %v2270 = vunpack.c.l.b16 %v2138
    %v2271 = vunpack.c.l.b16 %v2139
    %v2272 = vunpack.c.l.b16 %v2140
    %v2273 = vunpack.c.l.b16 %v2141
    %v2274 = vunpack.c.l.b16 %v2142
    %v2275 = vunpack.c.l.b16 %v2143
    %v2276 = vunpack.c.l.b16 %v2144
    %v2277 = vunpack.c.l.b16 %v2145
    %v2278 = vunpack.c.l.b16 %v2146
    %v2279 = vunpack.c.l.b16 %v2147
    %v2280 = vunpack.c.l.b16 %v2148
    %v2281 = vunpack.c.l.b16 %v2149
    %v2282 = vunpack.c.l.b16 %v2150
    %v2283 = vunpack.c.l.b16 %v2151
    %v2284 = vunpack.c.l.b16 %v2152
    %v2285 = vunpack.c.l.b16 %v2153
    %v2286 = vunpack.c.l.b16 %v2154
    %v2287 = vunpack.c.l.b16 %v2155
    %v2288 = vunpack.c.l.b16 %v2156
    %v2289 = vunpack.c.l.b16 %v2157
    %v2290 = vunpack.c.l.b16 %v2158
    %v2291 = vunpack.c.l.b16 %v2159
    %v2292 = vunpack.c.l.b16 %v2160
    %v2293 = vunpack.c.l.b16 %v2161
    %v2294 = vunpack.c.l.b16 %v2162
    %v2295 = vunpack.c.l.b16 %v2163
    %v2296 = vunpack.c.l.b16 %v2164
    %v2297 = vunpack.c.l.b16 %v2165
    %v2298 = vunpack.c.l.b16 %v2166
    %v2299 = vunpack.c.l.b16 %v2167
    %v2300 = vunpack.c.l.b16 %v2168
    %v2301 = vunpack.c.l.b16 %v2169
    %v2302 = vunpack.c.l.b16 %v2170
    %v2303 = vunpack.c.l.b16 %v2171
    %v2304 = vunpack.c.l.b16 %v2172
    %v2305 = vunpack.c.l.b16 %v2173
    %v2306 = vunpack.c.l.b16 %v2174
    %v2307 = vunpack.c.l.b16 %v2175
    %v2308 = vunpack.c.l.b16 %v2176
    %v2309 = vunpack.c.l.b16 %v2177
    %v2310 = vunpack.c.l.b16 %v2178
    %v2311 = vunpack.c.l.b16 %v2179
    %v2312 = vunpack.c.l.b16 %v2180
    %v2313 = vunpack.c.l.b16 %v2181
    %v2314 = vunpack.c.l.b16 %v2182
    %v2315 = vunpack.c.l.b16 %v2183
    %v2316 = vunpack.c.l.b16 %v2184
    %v2317 = vunpack.c.l.b16 %v2185
    %v2318 = vunpack.c.l.b16 %v2186
    %v2319 = vunpack.c.l.b16 %v2187
    %v2320 = vunpack.c.l.b16 %v2188
    %v2321 = vunpack.c.l.b16 %v2189
    %v2322 = vunpack.c.l.b16 %v2190
    %v2323 = vunpack.c.l.b16 %v2191
    %v2324 = vunpack.c.l.b16 %v2192
    %v2325 = vunpack.c.l.b16 %v2193
    %v2326 = vunpack.c.l.b16 %v2194
    %v2327 = vunpack.c.l.b16 %v2195
    %v2328 = vunpack.c.l.b16 %v2196
    %v2329 = vunpack.c.l.b16 %v2197
    %v2330 = vunpack.c.l.b16 %v2198
    %v2331 = vunpack.c.l.b16 %v2199
    %v2332 = vunpack.c.l.b16 %v2200
    %v2333 = vunpack.c.l.b16 %v2201
    %v2334 = vpack.c.b16 %v2271, %v2270
    %v2335 = vpack.c.b16 %v2273, %v2272
    %v2336 = vpack.c.b16 %v2275, %v2274
    %v2337 = vpack.c.b16 %v2277, %v2276
    %v2338 = vpack.c.b16 %v2279, %v2278
    %v2339 = vpack.c.b16 %v2281, %v2280
    %v2340 = vpack.c.b16 %v2283, %v2282
    %v2341 = vpack.c.b16 %v2285, %v2284
    %v2342 = vpack.c.b16 %v2287, %v2286
    %v2343 = vpack.c.b16 %v2289, %v2288
    %v2344 = vpack.c.b16 %v2291, %v2290
    %v2345 = vpack.c.b16 %v2293, %v2292
    %v2346 = vpack.c.b16 %v2295, %v2294
    %v2347 = vpack.c.b16 %v2297, %v2296
    %v2348 = vpack.c.b16 %v2299, %v2298
    %v2349 = vpack.c.b16 %v2301, %v2300
    %v2350 = vpack.c.b16 %v2303, %v2302
    %v2351 = vpack.c.b16 %v2305, %v2304
    %v2352 = vpack.c.b16 %v2307, %v2306
    %v2353 = vpack.c.b16 %v2309, %v2308
    %v2354 = vpack.c.b16 %v2311, %v2310
    %v2355 = vpack.c.b16 %v2313, %v2312
    %v2356 = vpack.c.b16 %v2315, %v2314
    %v2357 = vpack.c.b16 %v2317, %v2316
    %v2358 = vpack.c.b16 %v2319, %v2318
    %v2359 = vpack.c.b16 %v2321, %v2320
    %v2360 = vpack.c.b16 %v2323, %v2322
    %v2361 = vpack.c.b16 %v2325, %v2324
    %v2362 = vpack.c.b16 %v2327, %v2326
    %v2363 = vpack.c.b16 %v2329, %v2328
    %v2364 = vpack.c.b16 %v2331, %v2330
    %v2365 = vpack.c.b16 %v2333, %v2332
    %2398 = vmatpush.bf16.msra.mxu0 %v2341
    %2399 = vmatpush.bf16.msra.mxu0 %v2340
    %2400 = vmatpush.bf16.msra.mxu0 %v2339
    %2401 = vmatpush.bf16.msra.mxu0 %v2338
    %2402 = vmatpush.bf16.msra.mxu0 %v2337
    %2403 = vmatpush.bf16.msra.mxu0 %v2336
    %2404 = vmatpush.bf16.msra.mxu0 %v2335
    %2405 = vmatpush.bf16.msra.mxu0 %v2334
    %2406 = vmatmul.bf16.gmra.mxu0 %v2134
    %v2407 = vpop.f32.mrf.mxu0
    %v2408 = vadd.f32 %v2204, %v2407
    %v2409 = vpop.f32.mrf.mxu0
    %v2410 = vadd.f32 %v2204, %v2409
    %2411 = vdwg.mxu0
    %2412 = vmatpush.bf16.msra.mxu0 %v2349
    %2413 = vmatpush.bf16.msra.mxu0 %v2348
    %2414 = vmatpush.bf16.msra.mxu0 %v2347
    %2415 = vmatpush.bf16.msra.mxu0 %v2346
    %2416 = vmatpush.bf16.msra.mxu0 %v2345
    %2417 = vmatpush.bf16.msra.mxu0 %v2344
    %2418 = vmatpush.bf16.msra.mxu0 %v2343
    %2419 = vmatpush.bf16.msra.mxu0 %v2342
    %2420 = vmatmul.bf16.gmra.mxu0 %v2135
    %v2421 = vpop.f32.mrf.mxu0
    %v2422 = vadd.f32 %v2408, %v2421
    %v2423 = vpop.f32.mrf.mxu0
    %v2424 = vadd.f32 %v2410, %v2423
    %2425 = vdwg.mxu0
    %2426 = vmatpush.bf16.msra.mxu0 %v2357
    %2427 = vmatpush.bf16.msra.mxu0 %v2356
    %2428 = vmatpush.bf16.msra.mxu0 %v2355
    %2429 = vmatpush.bf16.msra.mxu0 %v2354
    %2430 = vmatpush.bf16.msra.mxu0 %v2353
    %2431 = vmatpush.bf16.msra.mxu0 %v2352
    %2432 = vmatpush.bf16.msra.mxu0 %v2351
    %2433 = vmatpush.bf16.msra.mxu0 %v2350
    %2434 = vmatmul.bf16.gmra.mxu0 %v2136
    %v2435 = vpop.f32.mrf.mxu0
    %v2436 = vadd.f32 %v2422, %v2435
    %v2437 = vpop.f32.mrf.mxu0
    %v2438 = vadd.f32 %v2424, %v2437
    %2439 = vdwg.mxu0
    %2440 = vmatpush.bf16.msra.mxu0 %v2365
    %2441 = vmatpush.bf16.msra.mxu0 %v2364
    %2442 = vmatpush.bf16.msra.mxu0 %v2363
    %2443 = vmatpush.bf16.msra.mxu0 %v2362
    %2444 = vmatpush.bf16.msra.mxu0 %v2361
    %2445 = vmatpush.bf16.msra.mxu0 %v2360
    %2446 = vmatpush.bf16.msra.mxu0 %v2359
    %2447 = vmatpush.bf16.msra.mxu0 %v2358
    %2448 = vmatmul.bf16.gmra.mxu0 %v2137
    %v2449 = vpop.f32.mrf.mxu0
    %v2450 = vadd.f32 %v2436, %v2449
    %v2451 = vpop.f32.mrf.mxu0
    %v2452 = vadd.f32 %v2438, %v2451
    %2453 = vdwg.mxu0
    %v2454 = vmax.f32 %v2450, 0.0
    %v2455 = vmax.f32 %v2452, 0.0
    %v2456 = vpack.c.bf16 %v2455, %v2454
    %v2457 = vld [vmem:[#allocation10] sm:$0xf]
    %v2458 = vld [vmem:[#allocation10 + $0x4] sm:$0xf]
    %v2459 = vld [vmem:[#allocation10 + $0x8] sm:$0xf]
    %v2460 = vld [vmem:[#allocation10 + $0xc] sm:$0xf]
    %v2461 = vld [vmem:[#allocation10 + $0x10] sm:$0xf]
    %v2462 = vld [vmem:[#allocation10 + $0x14] sm:$0xf]
    %v2463 = vld [vmem:[#allocation10 + $0x18] sm:$0xf]
    %v2464 = vld [vmem:[#allocation10 + $0x1c] sm:$0xf]
    %v2465 = vld [vmem:[#allocation10 + $0x20] sm:$0xf]
    %v2466 = vld [vmem:[#allocation10 + $0x24] sm:$0xf]
    %v2467 = vld [vmem:[#allocation10 + $0x28] sm:$0xf]
    %v2468 = vld [vmem:[#allocation10 + $0x2c] sm:$0xf]
    %v2469 = vld [vmem:[#allocation10 + $0x30] sm:$0xf]
    %v2470 = vld [vmem:[#allocation10 + $0x34] sm:$0xf]
    %v2471 = vld [vmem:[#allocation10 + $0x38] sm:$0xf]
    %v2472 = vld [vmem:[#allocation10 + $0x3c] sm:$0xf]
    %v2473 = vld [vmem:[%s6] sm:$0x1]
    %v2475 = vperm.slane %v2473, 0
    %v2493 = vunpack.c.l.b16 %v2457
    %v2494 = vunpack.c.l.b16 %v2458
    %v2495 = vunpack.c.l.b16 %v2459
    %v2496 = vunpack.c.l.b16 %v2460
    %v2497 = vunpack.c.l.b16 %v2461
    %v2498 = vunpack.c.l.b16 %v2462
    %v2499 = vunpack.c.l.b16 %v2463
    %v2500 = vunpack.c.l.b16 %v2464
    %v2501 = vunpack.c.l.b16 %v2465
    %v2502 = vunpack.c.l.b16 %v2466
    %v2503 = vunpack.c.l.b16 %v2467
    %v2504 = vunpack.c.l.b16 %v2468
    %v2505 = vunpack.c.l.b16 %v2469
    %v2506 = vunpack.c.l.b16 %v2470
    %v2507 = vunpack.c.l.b16 %v2471
    %v2508 = vunpack.c.l.b16 %v2472
    %v2509 = vpack.c.b16 %v2494, %v2493
    %v2510 = vpack.c.b16 %v2496, %v2495
    %v2511 = vpack.c.b16 %v2498, %v2497
    %v2512 = vpack.c.b16 %v2500, %v2499
    %v2513 = vpack.c.b16 %v2502, %v2501
    %v2514 = vpack.c.b16 %v2504, %v2503
    %v2515 = vpack.c.b16 %v2506, %v2505
    %v2516 = vpack.c.b16 %v2508, %v2507
    %2525 = vmatpush.bf16.msra.mxu0 %v2516
    %2526 = vmatpush.bf16.msra.mxu0 %v2515
    %2527 = vmatpush.bf16.msra.mxu0 %v2514
    %2528 = vmatpush.bf16.msra.mxu0 %v2513
    %2529 = vmatpush.bf16.msra.mxu0 %v2512
    %2530 = vmatpush.bf16.msra.mxu0 %v2511
    %2531 = vmatpush.bf16.msra.mxu0 %v2510
    %2532 = vmatpush.bf16.msra.mxu0 %v2509
    %2533 = vmatmul.bf16.gmra.mxu0 %v2456
    %v2534 = vpop.f32.mrf.mxu0
    %v2535 = vadd.f32 %v2475, %v2534
    %v2536 = vpop.f32.mrf.mxu0
    %v2537 = vadd.f32 %v2475, %v2536
    %2538 = vdwg.mxu0
    %v2539 = vpack.c.bf16 %v2535, %v2535
    %v2540 = vpack.c.bf16 %v2537, %v2537
    %2541 = vst [vmem:[#allocation11] sm:$0xf] %v2539
    %2542 = vst [vmem:[#allocation11 + $0x4] sm:$0xf] %v2540
    // Predicated region
    $region50: #{decoder_forward.1} parent=1 // pred_check
      _
    $region51: #{decoder_forward.1} parent=1 // pred_check_branch
      %2544 = sbr.rel (0) target = $region53
    $region52: #{decoder_forward.1} parent=1 // pred_region
      %2546 = vsyncadd [#allocation4], 0
      %s2547 = sshll.u32 [#allocation11], 4
      %s2548 = int_to_ptr.vmem [resolvable:$true] %s2547
      %s2549 = sshll.u32 %s7, 4
      %s2550 = int_to_ptr.hbm [resolvable:$true] %s2549
      %2555 = dma.vmem_to_hbm [thread:$0]  %s2548, 128, %s2550, [#allocation4], 64, 64, 4
    $region53: #{decoder_forward.1} parent=1 // pred_fallthru
      _
    // Predicated region
    $region54: #{decoder_forward.1} parent=1 // pred_check
      _
    $region55: #{decoder_forward.1} parent=1 // pred_check_branch
      %2557 = sbr.rel (0) target = $region57
    $region56: #{decoder_forward.1} parent=1 // pred_region
      %2559 = dma.done [#allocation4], 128
    $region57: #{decoder_forward.1} parent=1 // pred_fallthru
      _
    %2560 = vsyncpa [#allocation3], 1
    %2561 = vsyncpa [#allocation6], 1
    %2562 = vsyncpa [#allocation9], 1
    %2563 = vsyncpa [#allocation4], 1

</llo_original>
